<compile_context>
chip_gen: v7x
topology: tpu7x:2x2x1
jax: 0.10.0
libtpu: 0.0.40
codegen_flags: <defaults>
</compile_context>

<pallas_src>
import functools

import jax
import jax.numpy as jnp
from jax.experimental import pallas as pl
from jax.experimental.pallas import tpu as pltpu

LN_EPS = 1e-5
LANE = 128                       # lane-alignment for the hidden width
VMEM_BUDGET = 48 * 1024 * 1024   # conservative per-tile budget (fits v7x 64 MiB)
VMEM_CAP = 56 * 1024 * 1024      # never request more than this


def _round_up(n, m):
    return ((n + m - 1) // m) * m


def _layernorm(z, gamma, beta, inv_n, mask):
    """PyTorch nn.LayerNorm over the last dim (biased variance, eps=1e-5),
    two-pass (centered) variance in f32. `mask` zeroes the padded lanes in the
    variance sum; padded z columns are exact zeros so the mean sum is already
    correct without masking."""
    mean = jnp.sum(z, axis=-1, keepdims=True) * inv_n
    d = z - mean
    if mask is not None:
        d = d * mask
    var = jnp.sum(d * d, axis=-1, keepdims=True) * inv_n
    zn = d * jax.lax.rsqrt(var + LN_EPS)
    return zn * gamma[None, :] + beta[None, :]


def _modulator_kernel(
    x_ref,     # (TM, Fin_k)      input rows (pipelined over the grid)
    w0_ref,    # (Fin_k, Hp)      W0^T (padded), compute dtype
    p0_ref,    # (3, Hp)          [b0, gamma0, beta0] (padded), f32
    wh_ref,    # (L, Hp, Hp)      h-part of skip-layer weights, compute dtype
    wx_ref,    # (Fin_k, L*Hp)    x-part of skip-layer weights, compute dtype
    pl_ref,    # (L, 3, Hp)       [b_i, gamma_i, beta_i] (padded), f32
    *out_refs,                    # L refs of (TM, Hp): gating activations
    num_hidden_layers: int,
    hid: int,
    hid_p: int,
    residual_first: bool,
    compute_dtype,
):
    inv_h = jnp.float32(1.0 / hid)
    if hid_p != hid:
        col = jax.lax.broadcasted_iota(jnp.int32, (1, hid_p), 1)
        mask = (col < hid).astype(jnp.float32)
    else:
        mask = None

    x = x_ref[...].astype(jnp.float32)
    xm = x.astype(compute_dtype)                       # MXU operand only

    # ---- layer 0: FCBlock(in_features -> hidden_features) ----
    p0 = p0_ref[...]
    z = jnp.dot(xm, w0_ref[...], preferred_element_type=jnp.float32)
    z = z + p0[0][None, :]
    z = _layernorm(z, p0[1], p0[2], inv_h, mask)
    if residual_first:            # only when in_features == hidden_features;
        z = z + x                 # x is host-padded to Hp lanes in that case
    h = jnp.maximum(z, 0.0)

    # ---- x-contribution of every skip layer, hoisted out of the serial chain ----
    xw = jnp.dot(xm, wx_ref[...], preferred_element_type=jnp.float32)  # (TM, L*Hp)

    # ---- hidden layers with skip connection; each output is a gating layer ----
    for i in range(num_hidden_layers):
        pli = pl_ref[i]                                # (3, Hp)
        z = jnp.dot(h.astype(compute_dtype), wh_ref[i],
                    preferred_element_type=jnp.float32)
        z = z + xw[:, i * hid_p:(i + 1) * hid_p] + pli[0][None, :]
        z = _layernorm(z, pli[1], pli[2], inv_h, mask)
        h = jnp.maximum(z, 0.0)
        # lane-dense, unmasked store; activation freed immediately after
        out_refs[i][...] = h.astype(out_refs[i].dtype)


def modulator_mlp_forward(x, params, *, tile_m=1024,
                          compute_dtype=jnp.bfloat16, out_dtype=None):
    """x: (..., Fin). Returns list of `hidden_layers` arrays of shape (..., H).

    compute_dtype: dtype of the matmul operands (bf16 recommended on v6e/v7x;
    accumulation and all LayerNorm / elementwise math stay f32 — v5e-safe).
    out_dtype: dtype of the gating outputs (default: x.dtype).
    """
    w0t, b0, g0, be0, wt, b, g, be = params
    fin = x.shape[-1]
    hid = w0t.shape[1]
    L = wt.shape[0]
    assert L >= 1, "ModulatorMLP with hidden_layers=0 returns []"
    out_dtype = x.dtype if out_dtype is None else out_dtype

    residual_first = (fin == hid)
    hid_p = _round_up(hid, LANE)              # lane-pad the hidden width
    pad_w = hid_p - hid
    # If the first layer has a residual, pad x's columns to Hp so the in-kernel
    # residual add is lane-aligned (padded columns are zero → no-ops).
    fin_k = hid_p if (residual_first and hid_p != fin) else fin

    # ---- one-time host/XLA-side parameter repack (zero-padded, pre-cast) ----
    w0c = jnp.pad(w0t, ((0, fin_k - fin), (0, pad_w))).astype(compute_dtype)
    p0 = jnp.pad(jnp.stack([b0, g0, be0]),
                 ((0, 0), (0, pad_w))).astype(jnp.float32)              # (3, Hp)
    wh = jnp.pad(wt[:, :hid, :],
                 ((0, 0), (0, pad_w), (0, pad_w))).astype(compute_dtype)  # (L,Hp,Hp)
    wx = jnp.transpose(wt[:, hid:, :], (1, 0, 2))                        # (fin,L,hid)
    wx = jnp.pad(wx, ((0, fin_k - fin), (0, 0), (0, pad_w)))
    wx = wx.reshape(fin_k, L * hid_p).astype(compute_dtype)              # (Fin_k,L*Hp)
    pL = jnp.pad(jnp.stack([b, g, be], axis=1),
                 ((0, 0), (0, 0), (0, pad_w))).astype(jnp.float32)       # (L,3,Hp)

    lead_shape = x.shape[:-1]
    x2 = x.reshape(-1, fin)
    if fin_k != fin:
        x2 = jnp.pad(x2, ((0, 0), (0, fin_k - fin)))
    n_rows = x2.shape[0]

    # ---- row-tile selection ----
    cbytes = jnp.dtype(compute_dtype).itemsize
    obytes = jnp.dtype(out_dtype).itemsize
    xbytes = jnp.dtype(x2.dtype).itemsize
    sub32 = min(cbytes, obytes, xbytes) < 4
    row_align = 16 if sub32 else 8            # bf16 packs 16 rows per sublane group

    tm = min(int(tile_m), _round_up(n_rows, row_align))
    tm = max(row_align, _round_up(tm, row_align))

    # Ensure >=2 grid steps when the row count allows it (v7x: 2 TCs per chip).
    if -(-n_rows // tm) < 2:
        half = _round_up(max(1, (n_rows + 1) // 2), row_align)
        if half < tm:
            tm = half

    weight_bytes = (fin_k * hid_p * cbytes + 3 * hid_p * 4
                    + L * hid_p * hid_p * cbytes
                    + fin_k * L * hid_p * cbytes + L * 3 * hid_p * 4)

    def est_vmem(tm_):
        io = 2 * tm_ * fin_k * xbytes + 2 * L * tm_ * hid_p * obytes  # dbl-buffered x + L outs
        live = tm_ * (L + 3) * hid_p * 4 + 2 * tm_ * fin_k * 4        # xw + z/h + x copies
        return weight_bytes + io + live

    # Shrink the tile until it fits a conservative budget (v7x: 64 MiB VMEM).
    while tm > row_align and est_vmem(tm) > VMEM_BUDGET:
        tm = max(row_align, _round_up(tm // 2, row_align))

    n_pad = _round_up(n_rows, tm)
    if n_pad != n_rows:
        x2 = jnp.pad(x2, ((0, n_pad - n_rows), (0, 0)))
    grid = (n_pad // tm,)

    vmem_limit = int(min(VMEM_CAP, max(32 * 1024 * 1024, est_vmem(tm) + (4 << 20))))

    kernel = functools.partial(
        _modulator_kernel,
        num_hidden_layers=L,
        hid=hid,
        hid_p=hid_p,
        residual_first=residual_first,
        compute_dtype=compute_dtype,
    )

    def _param_spec(arr):
        # grid-invariant parameter: constant index_map + single buffering
        nd = arr.ndim
        return pl.BlockSpec(arr.shape, lambda i, _nd=nd: (0,) * _nd,
                            pipeline_mode=pl.Buffered(1))

    outs = pl.pallas_call(
        kernel,
        out_shape=tuple(jax.ShapeDtypeStruct((n_pad, hid_p), out_dtype)
                        for _ in range(L)),
        grid_spec=pltpu.PrefetchScalarGridSpec(
            num_scalar_prefetch=0,
            grid=grid,
            in_specs=[
                pl.BlockSpec((tm, fin_k), lambda i: (i, 0)),   # x rows (pipelined)
                _param_spec(w0c), _param_spec(p0), _param_spec(wh),
                _param_spec(wx), _param_spec(pL),
            ],
            # one lane-dense (TM, Hp) block per layer per row tile
            out_specs=[pl.BlockSpec((tm, hid_p), lambda i: (i, 0))
                       for _ in range(L)],
        ),
        compiler_params=pltpu.CompilerParams(
            dimension_semantics=("parallel",),
            vmem_limit_bytes=vmem_limit,
        ),
    )(x2, w0c, p0, wh, wx, pL)

    # Strip row/lane padding per layer (no-op when shapes are already aligned).
    # TODO(synk): expose the packed padded outputs directly when the consumer
    # can take them, to avoid these strip-slices entirely.
    return [o[:n_rows, :hid].reshape(*lead_shape, hid) for o in outs]


def init_params(key, in_features, hidden_features, hidden_layers):
    """Deterministic synthetic parameters (kaiming-like normals for linears,
    ones/zeros for LayerNorm affine). Weights stored pre-transposed (W^T)."""
    k0, k1, k2, k3 = jax.random.split(key, 4)
    fin, hid, L = in_features, hidden_features, hidden_layers
    w0t = jax.random.normal(k0, (fin, hid), jnp.float32) * (2.0 / fin) ** 0.5
    b0 = jax.random.normal(k1, (hid,), jnp.float32) * 0.01
    g0 = jnp.ones((hid,), jnp.float32)
    be0 = jnp.zeros((hid,), jnp.float32)
    wt = jax.random.normal(k2, (L, hid + fin, hid), jnp.float32) * (
        2.0 / (hid + fin)
    ) ** 0.5
    b = jax.random.normal(k3, (L, hid), jnp.float32) * 0.01
    g = jnp.ones((L, hid), jnp.float32)
    be = jnp.zeros((L, hid), jnp.float32)
    return (w0t, b0, g0, be0, wt, b, g, be)


def _reference(x, params, compute_dtype=jnp.float32):
    """Pure-JAX reference mirroring the PyTorch forward (cat(h, x) @ W^T),
    with optional matmul-operand casting for checking the bf16 path."""
    w0t, b0, g0, be0, wt, b, g, be = params
    fin, hid = w0t.shape

    def ln(z, gamma, beta):
        m = jnp.mean(z, -1, keepdims=True)
        v = jnp.mean(jnp.square(z - m), -1, keepdims=True)
        return (z - m) / jnp.sqrt(v + LN_EPS) * gamma + beta

    def mm(a, w):
        return jnp.dot(a.astype(compute_dtype), w.astype(compute_dtype),
                       preferred_element_type=jnp.float32)

    xf = x.astype(jnp.float32)
    h = ln(mm(x, w0t) + b0, g0, be0)
    if fin == hid:
        h = h + xf
    h = jax.nn.relu(h)
    gating = []
    for i in range(wt.shape[0]):
        inp = jnp.concatenate([h, xf], axis=-1)
        h = jax.nn.relu(ln(mm(inp, wt[i]) + b[i], g[i], be[i]))
        gating.append(h)
    return gating


if __name__ == "__main__":
    in_features = 16
    hidden_features = 32
    hidden_layers = 3
    out_features = 3  # unused by ModulatorMLP.forward (final layer never called)

    key = jax.random.PRNGKey(0)
    kx, kp = jax.random.split(key)
    x = jax.random.normal(kx, (2, 64, in_features), jnp.float32)  # (..., Fin)
    params = init_params(kp, in_features, hidden_features, hidden_layers)

    # --- exact-semantics check: f32 matmul operands, f32 outputs ---
    gating = modulator_mlp_forward(x, params, tile_m=1024,
                                   compute_dtype=jnp.float32)
    gating = [jax.block_until_ready(gg) for gg in gating]
    ref = _reference(x, params, compute_dtype=jnp.float32)
    for got, want in zip(gating, ref):
        assert got.shape == want.shape == (2, 64, hidden_features)
        err = float(jnp.max(jnp.abs(got - want)))
        assert err < 1e-3, err

    # --- performance path: bf16 matmul operands (f32 accumulation / LN) ---
    gating_bf = modulator_mlp_forward(x, params, tile_m=1024,
                                      compute_dtype=jnp.bfloat16,
                                      out_dtype=jnp.float32)
    gating_bf = [jax.block_until_ready(gg) for gg in gating_bf]
    ref_bf = _reference(x, params, compute_dtype=jnp.bfloat16)
    for got, want in zip(gating_bf, ref_bf):
        err = float(jnp.max(jnp.abs(got.astype(jnp.float32) - want)))
        assert err < 1e-1, err

    print("KERNEL_OK")
</pallas_src>

<mosaic_0001>
module attributes {stable_mosaic.version = 11 : i64} {
  func.func @_modulator_kernel(%arg0: i32, %arg1: memref<64x16xf32, #tpu.memory_space<vmem>>, %arg2: memref<16x128xf32, #tpu.memory_space<vmem>>, %arg3: memref<3x128xf32, #tpu.memory_space<vmem>>, %arg4: memref<3x128x128xf32, #tpu.memory_space<vmem>>, %arg5: memref<16x384xf32, #tpu.memory_space<vmem>>, %arg6: memref<3x3x128xf32, #tpu.memory_space<vmem>>, %arg7: memref<64x128xf32, #tpu.memory_space<vmem>>, %arg8: memref<64x128xf32, #tpu.memory_space<vmem>>, %arg9: memref<64x128xf32, #tpu.memory_space<vmem>>) attributes {dimension_semantics = [#tpu.dimension_semantics<parallel>], iteration_bounds = array<i64: 2>, scalar_prefetch = 0 : i64, scratch_operands = 0 : i64, tpu.core_type = #tpu.core_type<tc>, window_params = [{transform_indices = @transform_0, window_bounds = array<i64: 64, 16>}, {pipeline_mode = #tpu.pipeline_mode<synchronous>, transform_indices = @transform_1, window_bounds = array<i64: 16, 128>}, {pipeline_mode = #tpu.pipeline_mode<synchronous>, transform_indices = @transform_2, window_bounds = array<i64: 3, 128>}, {pipeline_mode = #tpu.pipeline_mode<synchronous>, transform_indices = @transform_3, window_bounds = array<i64: 3, 128, 128>}, {pipeline_mode = #tpu.pipeline_mode<synchronous>, transform_indices = @transform_4, window_bounds = array<i64: 16, 384>}, {pipeline_mode = #tpu.pipeline_mode<synchronous>, transform_indices = @transform_5, window_bounds = array<i64: 3, 3, 128>}, {transform_indices = @transform_6, window_bounds = array<i64: 64, 128>}, {transform_indices = @transform_7, window_bounds = array<i64: 64, 128>}, {transform_indices = @transform_8, window_bounds = array<i64: 64, 128>}]} {
    %0 = tpu.iota {dimensions = array<i32: 1>} : vector<1x128xi32>
    %c32_i32 = arith.constant 32 : i32
    %1 = vector.broadcast %c32_i32 : i32 to vector<1x128xi32>
    %2 = arith.cmpi slt, %0, %1 : vector<1x128xi32>
    %3 = arith.extui %2 : vector<1x128xi1> to vector<1x128xi32>
    %4 = arith.sitofp %3 : vector<1x128xi32> to vector<1x128xf32>
    %c0 = arith.constant 0 : index
    %c0_0 = arith.constant 0 : index
    %5 = vector.load %arg1[%c0, %c0_0] : memref<64x16xf32, #tpu.memory_space<vmem>>, vector<64x16xf32>
    %c0_1 = arith.constant 0 : index
    %c0_2 = arith.constant 0 : index
    %6 = vector.load %arg3[%c0_1, %c0_2] : memref<3x128xf32, #tpu.memory_space<vmem>>, vector<3x128xf32>
    %c0_3 = arith.constant 0 : index
    %c0_4 = arith.constant 0 : index
    %7 = vector.load %arg2[%c0_3, %c0_4] : memref<16x128xf32, #tpu.memory_space<vmem>>, vector<16x128xf32>
    %cst = arith.constant dense<0.000000e+00> : vector<64x128xf32>
    %8 = tpu.matmul %5, %7, %cst {dimension_numbers = #tpu.dot_dimension_numbers<[1], [0], [0], [1], [0, 0, 1, 1], [], []>} : vector<64x16xf32>, vector<16x128xf32>, vector<64x128xf32> -> vector<64x128xf32>
    %9 = vector.extract_strided_slice %6 {offsets = [0, 0], sizes = [1, 128], strides = [1, 1]} : vector<3x128xf32> to vector<1x128xf32>
    %10 = vector.shape_cast %9 : vector<1x128xf32> to vector<128xf32>
    %11 = vector.shape_cast %10 : vector<128xf32> to vector<1x128xf32>
    %12 = vector.broadcast %11 : vector<1x128xf32> to vector<64x128xf32>
    %13 = arith.addf %8, %12 : vector<64x128xf32>
    %14 = vector.extract_strided_slice %6 {offsets = [1, 0], sizes = [1, 128], strides = [1, 1]} : vector<3x128xf32> to vector<1x128xf32>
    %15 = vector.shape_cast %14 : vector<1x128xf32> to vector<128xf32>
    %16 = vector.extract_strided_slice %6 {offsets = [2, 0], sizes = [1, 128], strides = [1, 1]} : vector<3x128xf32> to vector<1x128xf32>
    %17 = vector.shape_cast %16 : vector<1x128xf32> to vector<128xf32>
    %cst_5 = arith.constant dense<0.000000e+00> : vector<64xf32>
    %18 = vector.multi_reduction <add>, %13, %cst_5 [1] : vector<64x128xf32> to vector<64xf32>
    %19 = vector.shape_cast %18 : vector<64xf32> to vector<64x1xf32>
    %cst_6 = arith.constant 3.125000e-02 : f32
    %20 = vector.broadcast %cst_6 : f32 to vector<64x1xf32>
    %21 = arith.mulf %19, %20 : vector<64x1xf32>
    %22 = vector.broadcast %21 : vector<64x1xf32> to vector<64x128xf32>
    %23 = arith.subf %13, %22 : vector<64x128xf32>
    %24 = vector.broadcast %4 : vector<1x128xf32> to vector<64x128xf32>
    %25 = arith.mulf %23, %24 : vector<64x128xf32>
    %26 = arith.mulf %25, %25 : vector<64x128xf32>
    %cst_7 = arith.constant dense<0.000000e+00> : vector<64xf32>
    %27 = vector.multi_reduction <add>, %26, %cst_7 [1] : vector<64x128xf32> to vector<64xf32>
    %28 = vector.shape_cast %27 : vector<64xf32> to vector<64x1xf32>
    %cst_8 = arith.constant 3.125000e-02 : f32
    %29 = vector.broadcast %cst_8 : f32 to vector<64x1xf32>
    %30 = arith.mulf %28, %29 : vector<64x1xf32>
    %cst_9 = arith.constant 9.99999974E-6 : f32
    %31 = vector.broadcast %cst_9 : f32 to vector<64x1xf32>
    %32 = arith.addf %30, %31 : vector<64x1xf32>
    %33 = math.rsqrt %32 : vector<64x1xf32>
    %34 = vector.broadcast %33 : vector<64x1xf32> to vector<64x128xf32>
    %35 = arith.mulf %25, %34 : vector<64x128xf32>
    %36 = vector.shape_cast %15 : vector<128xf32> to vector<1x128xf32>
    %37 = vector.broadcast %36 : vector<1x128xf32> to vector<64x128xf32>
    %38 = arith.mulf %35, %37 : vector<64x128xf32>
    %39 = vector.shape_cast %17 : vector<128xf32> to vector<1x128xf32>
    %40 = vector.broadcast %39 : vector<1x128xf32> to vector<64x128xf32>
    %41 = arith.addf %38, %40 : vector<64x128xf32>
    %cst_10 = arith.constant 0.000000e+00 : f32
    %42 = vector.broadcast %cst_10 : f32 to vector<64x128xf32>
    %43 = arith.maximumf %41, %42 : vector<64x128xf32>
    %c0_11 = arith.constant 0 : index
    %c0_12 = arith.constant 0 : index
    %44 = vector.load %arg5[%c0_11, %c0_12] : memref<16x384xf32, #tpu.memory_space<vmem>>, vector<16x384xf32>
    %cst_13 = arith.constant dense<0.000000e+00> : vector<64x384xf32>
    %45 = tpu.matmul %5, %44, %cst_13 {dimension_numbers = #tpu.dot_dimension_numbers<[1], [0], [0], [1], [0, 0, 1, 1], [], []>} : vector<64x16xf32>, vector<16x384xf32>, vector<64x384xf32> -> vector<64x384xf32>
    %c0_14 = arith.constant 0 : index
    %c0_15 = arith.constant 0 : index
    %c0_16 = arith.constant 0 : index
    %46 = vector.load %arg6[%c0_14, %c0_15, %c0_16] : memref<3x3x128xf32, #tpu.memory_space<vmem>>, vector<1x3x128xf32>
    %47 = vector.shape_cast %46 : vector<1x3x128xf32> to vector<3x128xf32>
    %c0_17 = arith.constant 0 : index
    %c0_18 = arith.constant 0 : index
    %c0_19 = arith.constant 0 : index
    %48 = vector.load %arg4[%c0_17, %c0_18, %c0_19] : memref<3x128x128xf32, #tpu.memory_space<vmem>>, vector<1x128x128xf32>
    %49 = vector.shape_cast %48 : vector<1x128x128xf32> to vector<128x128xf32>
    %cst_20 = arith.constant dense<0.000000e+00> : vector<64x128xf32>
    %50 = tpu.matmul %43, %49, %cst_20 {dimension_numbers = #tpu.dot_dimension_numbers<[1], [0], [0], [1], [0, 0, 1, 1], [], []>} : vector<64x128xf32>, vector<128x128xf32>, vector<64x128xf32> -> vector<64x128xf32>
    %51 = vector.extract_strided_slice %45 {offsets = [0, 0], sizes = [64, 128], strides = [1, 1]} : vector<64x384xf32> to vector<64x128xf32>
    %52 = arith.addf %50, %51 : vector<64x128xf32>
    %53 = vector.extract_strided_slice %47 {offsets = [0, 0], sizes = [1, 128], strides = [1, 1]} : vector<3x128xf32> to vector<1x128xf32>
    %54 = vector.shape_cast %53 : vector<1x128xf32> to vector<128xf32>
    %55 = vector.shape_cast %54 : vector<128xf32> to vector<1x128xf32>
    %56 = vector.broadcast %55 : vector<1x128xf32> to vector<64x128xf32>
    %57 = arith.addf %52, %56 : vector<64x128xf32>
    %58 = vector.extract_strided_slice %47 {offsets = [1, 0], sizes = [1, 128], strides = [1, 1]} : vector<3x128xf32> to vector<1x128xf32>
    %59 = vector.shape_cast %58 : vector<1x128xf32> to vector<128xf32>
    %60 = vector.extract_strided_slice %47 {offsets = [2, 0], sizes = [1, 128], strides = [1, 1]} : vector<3x128xf32> to vector<1x128xf32>
    %61 = vector.shape_cast %60 : vector<1x128xf32> to vector<128xf32>
    %cst_21 = arith.constant dense<0.000000e+00> : vector<64xf32>
    %62 = vector.multi_reduction <add>, %57, %cst_21 [1] : vector<64x128xf32> to vector<64xf32>
    %63 = vector.shape_cast %62 : vector<64xf32> to vector<64x1xf32>
    %cst_22 = arith.constant 3.125000e-02 : f32
    %64 = vector.broadcast %cst_22 : f32 to vector<64x1xf32>
    %65 = arith.mulf %63, %64 : vector<64x1xf32>
    %66 = vector.broadcast %65 : vector<64x1xf32> to vector<64x128xf32>
    %67 = arith.subf %57, %66 : vector<64x128xf32>
    %68 = vector.broadcast %4 : vector<1x128xf32> to vector<64x128xf32>
    %69 = arith.mulf %67, %68 : vector<64x128xf32>
    %70 = arith.mulf %69, %69 : vector<64x128xf32>
    %cst_23 = arith.constant dense<0.000000e+00> : vector<64xf32>
    %71 = vector.multi_reduction <add>, %70, %cst_23 [1] : vector<64x128xf32> to vector<64xf32>
    %72 = vector.shape_cast %71 : vector<64xf32> to vector<64x1xf32>
    %cst_24 = arith.constant 3.125000e-02 : f32
    %73 = vector.broadcast %cst_24 : f32 to vector<64x1xf32>
    %74 = arith.mulf %72, %73 : vector<64x1xf32>
    %cst_25 = arith.constant 9.99999974E-6 : f32
    %75 = vector.broadcast %cst_25 : f32 to vector<64x1xf32>
    %76 = arith.addf %74, %75 : vector<64x1xf32>
    %77 = math.rsqrt %76 : vector<64x1xf32>
    %78 = vector.broadcast %77 : vector<64x1xf32> to vector<64x128xf32>
    %79 = arith.mulf %69, %78 : vector<64x128xf32>
    %80 = vector.shape_cast %59 : vector<128xf32> to vector<1x128xf32>
    %81 = vector.broadcast %80 : vector<1x128xf32> to vector<64x128xf32>
    %82 = arith.mulf %79, %81 : vector<64x128xf32>
    %83 = vector.shape_cast %61 : vector<128xf32> to vector<1x128xf32>
    %84 = vector.broadcast %83 : vector<1x128xf32> to vector<64x128xf32>
    %85 = arith.addf %82, %84 : vector<64x128xf32>
    %cst_26 = arith.constant 0.000000e+00 : f32
    %86 = vector.broadcast %cst_26 : f32 to vector<64x128xf32>
    %87 = arith.maximumf %85, %86 : vector<64x128xf32>
    %c0_27 = arith.constant 0 : index
    %c0_28 = arith.constant 0 : index
    %88 = vector.load %arg7[%c0_27, %c0_28] : memref<64x128xf32, #tpu.memory_space<vmem>>, vector<64x128xf32>
    tpu.vector_store %arg7[%c0_27, %c0_28], %87 {strides = array<i32>} : memref<64x128xf32, #tpu.memory_space<vmem>>, vector<64x128xf32>,
    %c1 = arith.constant 1 : index
    %c0_29 = arith.constant 0 : index
    %c0_30 = arith.constant 0 : index
    %89 = vector.load %arg6[%c1, %c0_29, %c0_30] : memref<3x3x128xf32, #tpu.memory_space<vmem>>, vector<1x3x128xf32>
    %90 = vector.shape_cast %89 : vector<1x3x128xf32> to vector<3x128xf32>
    %c1_31 = arith.constant 1 : index
    %c0_32 = arith.constant 0 : index
    %c0_33 = arith.constant 0 : index
    %91 = vector.load %arg4[%c1_31, %c0_32, %c0_33] : memref<3x128x128xf32, #tpu.memory_space<vmem>>, vector<1x128x128xf32>
    %92 = vector.shape_cast %91 : vector<1x128x128xf32> to vector<128x128xf32>
    %cst_34 = arith.constant dense<0.000000e+00> : vector<64x128xf32>
    %93 = tpu.matmul %87, %92, %cst_34 {dimension_numbers = #tpu.dot_dimension_numbers<[1], [0], [0], [1], [0, 0, 1, 1], [], []>} : vector<64x128xf32>, vector<128x128xf32>, vector<64x128xf32> -> vector<64x128xf32>
    %94 = vector.extract_strided_slice %45 {offsets = [0, 128], sizes = [64, 128], strides = [1, 1]} : vector<64x384xf32> to vector<64x128xf32>
    %95 = arith.addf %93, %94 : vector<64x128xf32>
    %96 = vector.extract_strided_slice %90 {offsets = [0, 0], sizes = [1, 128], strides = [1, 1]} : vector<3x128xf32> to vector<1x128xf32>
    %97 = vector.shape_cast %96 : vector<1x128xf32> to vector<128xf32>
    %98 = vector.shape_cast %97 : vector<128xf32> to vector<1x128xf32>
    %99 = vector.broadcast %98 : vector<1x128xf32> to vector<64x128xf32>
    %100 = arith.addf %95, %99 : vector<64x128xf32>
    %101 = vector.extract_strided_slice %90 {offsets = [1, 0], sizes = [1, 128], strides = [1, 1]} : vector<3x128xf32> to vector<1x128xf32>
    %102 = vector.shape_cast %101 : vector<1x128xf32> to vector<128xf32>
    %103 = vector.extract_strided_slice %90 {offsets = [2, 0], sizes = [1, 128], strides = [1, 1]} : vector<3x128xf32> to vector<1x128xf32>
    %104 = vector.shape_cast %103 : vector<1x128xf32> to vector<128xf32>
    %cst_35 = arith.constant dense<0.000000e+00> : vector<64xf32>
    %105 = vector.multi_reduction <add>, %100, %cst_35 [1] : vector<64x128xf32> to vector<64xf32>
    %106 = vector.shape_cast %105 : vector<64xf32> to vector<64x1xf32>
    %cst_36 = arith.constant 3.125000e-02 : f32
    %107 = vector.broadcast %cst_36 : f32 to vector<64x1xf32>
    %108 = arith.mulf %106, %107 : vector<64x1xf32>
    %109 = vector.broadcast %108 : vector<64x1xf32> to vector<64x128xf32>
    %110 = arith.subf %100, %109 : vector<64x128xf32>
    %111 = vector.broadcast %4 : vector<1x128xf32> to vector<64x128xf32>
    %112 = arith.mulf %110, %111 : vector<64x128xf32>
    %113 = arith.mulf %112, %112 : vector<64x128xf32>
    %cst_37 = arith.constant dense<0.000000e+00> : vector<64xf32>
    %114 = vector.multi_reduction <add>, %113, %cst_37 [1] : vector<64x128xf32> to vector<64xf32>
    %115 = vector.shape_cast %114 : vector<64xf32> to vector<64x1xf32>
    %cst_38 = arith.constant 3.125000e-02 : f32
    %116 = vector.broadcast %cst_38 : f32 to vector<64x1xf32>
    %117 = arith.mulf %115, %116 : vector<64x1xf32>
    %cst_39 = arith.constant 9.99999974E-6 : f32
    %118 = vector.broadcast %cst_39 : f32 to vector<64x1xf32>
    %119 = arith.addf %117, %118 : vector<64x1xf32>
    %120 = math.rsqrt %119 : vector<64x1xf32>
    %121 = vector.broadcast %120 : vector<64x1xf32> to vector<64x128xf32>
    %122 = arith.mulf %112, %121 : vector<64x128xf32>
    %123 = vector.shape_cast %102 : vector<128xf32> to vector<1x128xf32>
    %124 = vector.broadcast %123 : vector<1x128xf32> to vector<64x128xf32>
    %125 = arith.mulf %122, %124 : vector<64x128xf32>
    %126 = vector.shape_cast %104 : vector<128xf32> to vector<1x128xf32>
    %127 = vector.broadcast %126 : vector<1x128xf32> to vector<64x128xf32>
    %128 = arith.addf %125, %127 : vector<64x128xf32>
    %cst_40 = arith.constant 0.000000e+00 : f32
    %129 = vector.broadcast %cst_40 : f32 to vector<64x128xf32>
    %130 = arith.maximumf %128, %129 : vector<64x128xf32>
    %c0_41 = arith.constant 0 : index
    %c0_42 = arith.constant 0 : index
    %131 = vector.load %arg8[%c0_41, %c0_42] : memref<64x128xf32, #tpu.memory_space<vmem>>, vector<64x128xf32>
    tpu.vector_store %arg8[%c0_41, %c0_42], %130 {strides = array<i32>} : memref<64x128xf32, #tpu.memory_space<vmem>>, vector<64x128xf32>,
    %c2 = arith.constant 2 : index
    %c0_43 = arith.constant 0 : index
    %c0_44 = arith.constant 0 : index
    %132 = vector.load %arg6[%c2, %c0_43, %c0_44] : memref<3x3x128xf32, #tpu.memory_space<vmem>>, vector<1x3x128xf32>
    %133 = vector.shape_cast %132 : vector<1x3x128xf32> to vector<3x128xf32>
    %c2_45 = arith.constant 2 : index
    %c0_46 = arith.constant 0 : index
    %c0_47 = arith.constant 0 : index
    %134 = vector.load %arg4[%c2_45, %c0_46, %c0_47] : memref<3x128x128xf32, #tpu.memory_space<vmem>>, vector<1x128x128xf32>
    %135 = vector.shape_cast %134 : vector<1x128x128xf32> to vector<128x128xf32>
    %cst_48 = arith.constant dense<0.000000e+00> : vector<64x128xf32>
    %136 = tpu.matmul %130, %135, %cst_48 {dimension_numbers = #tpu.dot_dimension_numbers<[1], [0], [0], [1], [0, 0, 1, 1], [], []>} : vector<64x128xf32>, vector<128x128xf32>, vector<64x128xf32> -> vector<64x128xf32>
    %137 = vector.extract_strided_slice %45 {offsets = [0, 256], sizes = [64, 128], strides = [1, 1]} : vector<64x384xf32> to vector<64x128xf32>
    %138 = arith.addf %136, %137 : vector<64x128xf32>
    %139 = vector.extract_strided_slice %133 {offsets = [0, 0], sizes = [1, 128], strides = [1, 1]} : vector<3x128xf32> to vector<1x128xf32>
    %140 = vector.shape_cast %139 : vector<1x128xf32> to vector<128xf32>
    %141 = vector.shape_cast %140 : vector<128xf32> to vector<1x128xf32>
    %142 = vector.broadcast %141 : vector<1x128xf32> to vector<64x128xf32>
    %143 = arith.addf %138, %142 : vector<64x128xf32>
    %144 = vector.extract_strided_slice %133 {offsets = [1, 0], sizes = [1, 128], strides = [1, 1]} : vector<3x128xf32> to vector<1x128xf32>
    %145 = vector.shape_cast %144 : vector<1x128xf32> to vector<128xf32>
    %146 = vector.extract_strided_slice %133 {offsets = [2, 0], sizes = [1, 128], strides = [1, 1]} : vector<3x128xf32> to vector<1x128xf32>
    %147 = vector.shape_cast %146 : vector<1x128xf32> to vector<128xf32>
    %cst_49 = arith.constant dense<0.000000e+00> : vector<64xf32>
    %148 = vector.multi_reduction <add>, %143, %cst_49 [1] : vector<64x128xf32> to vector<64xf32>
    %149 = vector.shape_cast %148 : vector<64xf32> to vector<64x1xf32>
    %cst_50 = arith.constant 3.125000e-02 : f32
    %150 = vector.broadcast %cst_50 : f32 to vector<64x1xf32>
    %151 = arith.mulf %149, %150 : vector<64x1xf32>
    %152 = vector.broadcast %151 : vector<64x1xf32> to vector<64x128xf32>
    %153 = arith.subf %143, %152 : vector<64x128xf32>
    %154 = vector.broadcast %4 : vector<1x128xf32> to vector<64x128xf32>
    %155 = arith.mulf %153, %154 : vector<64x128xf32>
    %156 = arith.mulf %155, %155 : vector<64x128xf32>
    %cst_51 = arith.constant dense<0.000000e+00> : vector<64xf32>
    %157 = vector.multi_reduction <add>, %156, %cst_51 [1] : vector<64x128xf32> to vector<64xf32>
    %158 = vector.shape_cast %157 : vector<64xf32> to vector<64x1xf32>
    %cst_52 = arith.constant 3.125000e-02 : f32
    %159 = vector.broadcast %cst_52 : f32 to vector<64x1xf32>
    %160 = arith.mulf %158, %159 : vector<64x1xf32>
    %cst_53 = arith.constant 9.99999974E-6 : f32
    %161 = vector.broadcast %cst_53 : f32 to vector<64x1xf32>
    %162 = arith.addf %160, %161 : vector<64x1xf32>
    %163 = math.rsqrt %162 : vector<64x1xf32>
    %164 = vector.broadcast %163 : vector<64x1xf32> to vector<64x128xf32>
    %165 = arith.mulf %155, %164 : vector<64x128xf32>
    %166 = vector.shape_cast %145 : vector<128xf32> to vector<1x128xf32>
    %167 = vector.broadcast %166 : vector<1x128xf32> to vector<64x128xf32>
    %168 = arith.mulf %165, %167 : vector<64x128xf32>
    %169 = vector.shape_cast %147 : vector<128xf32> to vector<1x128xf32>
    %170 = vector.broadcast %169 : vector<1x128xf32> to vector<64x128xf32>
    %171 = arith.addf %168, %170 : vector<64x128xf32>
    %cst_54 = arith.constant 0.000000e+00 : f32
    %172 = vector.broadcast %cst_54 : f32 to vector<64x128xf32>
    %173 = arith.maximumf %171, %172 : vector<64x128xf32>
    %c0_55 = arith.constant 0 : index
    %c0_56 = arith.constant 0 : index
    %174 = vector.load %arg9[%c0_55, %c0_56] : memref<64x128xf32, #tpu.memory_space<vmem>>, vector<64x128xf32>
    tpu.vector_store %arg9[%c0_55, %c0_56], %173 {strides = array<i32>} : memref<64x128xf32, #tpu.memory_space<vmem>>, vector<64x128xf32>,
    return
  }
  func.func @transform_0(%arg0: i32) -> (i32, i32) {
    %c0_i32 = arith.constant 0 : i32
    %c0_i32_0 = arith.constant 0 : i32
    return %arg0, %c0_i32 : i32, i32
  }
  func.func @transform_1(%arg0: i32) -> (i32, i32) {
    %c0_i32 = arith.constant 0 : i32
    %c0_i32_0 = arith.constant 0 : i32
    %c0_i32_1 = arith.constant 0 : i32
    return %c0_i32, %c0_i32_0 : i32, i32
  }
  func.func @transform_2(%arg0: i32) -> (i32, i32) {
    %c0_i32 = arith.constant 0 : i32
    %c0_i32_0 = arith.constant 0 : i32
    %c0_i32_1 = arith.constant 0 : i32
    return %c0_i32, %c0_i32_0 : i32, i32
  }
  func.func @transform_3(%arg0: i32) -> (i32, i32, i32) {
    %c0_i32 = arith.constant 0 : i32
    %c0_i32_0 = arith.constant 0 : i32
    %c0_i32_1 = arith.constant 0 : i32
    %c0_i32_2 = arith.constant 0 : i32
    return %c0_i32, %c0_i32_0, %c0_i32_1 : i32, i32, i32
  }
  func.func @transform_4(%arg0: i32) -> (i32, i32) {
    %c0_i32 = arith.constant 0 : i32
    %c0_i32_0 = arith.constant 0 : i32
    %c0_i32_1 = arith.constant 0 : i32
    return %c0_i32, %c0_i32_0 : i32, i32
  }
  func.func @transform_5(%arg0: i32) -> (i32, i32, i32) {
    %c0_i32 = arith.constant 0 : i32
    %c0_i32_0 = arith.constant 0 : i32
    %c0_i32_1 = arith.constant 0 : i32
    %c0_i32_2 = arith.constant 0 : i32
    return %c0_i32, %c0_i32_0, %c0_i32_1 : i32, i32, i32
  }
  func.func @transform_6(%arg0: i32) -> (i32, i32) {
    %c0_i32 = arith.constant 0 : i32
    %c0_i32_0 = arith.constant 0 : i32
    return %arg0, %c0_i32 : i32, i32
  }
  func.func @transform_7(%arg0: i32) -> (i32, i32) {
    %c0_i32 = arith.constant 0 : i32
    %c0_i32_0 = arith.constant 0 : i32
    return %arg0, %c0_i32 : i32, i32
  }
  func.func @transform_8(%arg0: i32) -> (i32, i32) {
    %c0_i32 = arith.constant 0 : i32
    %c0_i32_0 = arith.constant 0 : i32
    return %arg0, %c0_i32 : i32, i32
  }
}

</mosaic_0001>

<llo_original>
// kernel: tpu_custom_call.1
$region0: #{tpu_custom_call.1}
  #allocation0 [shape = 'u32[]', space=smem, size = 0x4, offset = 0x4, fixed_abs, tag = 'smem constant byte address 0x4 - core index']
  #allocation1 [shape = 'u32[144,128]{1,0:T(1,128)}', space=vmem, size = 0x12000, scoped, tag = 'internal scratch']
  %s0 = inlined_call_operand.vmem [shape: f32[128,16], index: 0, kind: input, shape index: {}]
  %s1 = inlined_call_operand.vmem [shape: f32[16,128], index: 1, kind: input, shape index: {}]
  %s2 = inlined_call_operand.vmem [shape: f32[3,128], index: 2, kind: input, shape index: {}]
  %s3 = inlined_call_operand.hbm [shape: f32[3,128,128], index: 3, kind: input, shape index: {}]
  %s4 = inlined_call_operand.vmem [shape: f32[16,384], index: 4, kind: input, shape index: {}]
  %s5 = inlined_call_operand.vmem [shape: f32[3,3,128], index: 5, kind: input, shape index: {}]
  %s6 = inlined_call_operand.hbm [shape: f32[128,128], index: 6, kind: output, shape index: {0}]
  %s7 = inlined_call_operand.hbm [shape: f32[128,128], index: 7, kind: output, shape index: {1}]
  %s8 = inlined_call_operand.hbm [shape: f32[128,128], index: 8, kind: output, shape index: {2}]
  %9 = xla_tuple %s6, %s7, %s8
  %s10 = sld [smem:[#allocation0]]
  $region77: #{tpu_custom_call.1} parent=0
    _
  %s12 = ssub.s32 1, %s10
  %s13 = scalar_select 0, %s12, %s10
  $region1: #{tpu_custom_call.1} parent=0
    #allocation2 [shape = 'u8[196608]{0}', space=vmem, size = 0x30000, scoped, tag = 'input window, operand 3, single buffered']
    #allocation3 [shape = 's32[2]{0}', space=sflag, size = 0x8, scoped, tag = 'scoped memory for tpu_custom_call.1']
    #allocation4 [shape = 's32[2]{0}', space=sflag, size = 0x8, scoped, tag = 'scoped memory for tpu_custom_call.1']
    #allocation5 [shape = 'u8[65536]{0}', space=vmem, size = 0x10000, scoped, tag = 'output window, operand 0']
    #allocation6 [shape = 'u8[65536]{0}', space=vmem, size = 0x10000, scoped, tag = 'output window, operand 1']
    #allocation7 [shape = 's32[2]{0}', space=sflag, size = 0x8, scoped, tag = 'scoped memory for tpu_custom_call.1']
    #allocation8 [shape = 'u8[65536]{0}', space=vmem, size = 0x10000, scoped, tag = 'output window, operand 2']
    %14 = vsyncpa [#allocation3], 0
    %15 = vsyncpa [#allocation4], 0
    %s16 = scalar_lea.sflag [#allocation4], 1
    %17 = vsyncpa %s16, 0
    %18 = vsyncpa [#allocation7], 0
    %s19 = scalar_lea.sflag [#allocation7], 1
    %20 = vsyncpa %s19, 0
    loop: start=0, step=1, limit=4
    $region2: #{tpu_custom_call.1} parent=1 // loop_pre_header
      _
    $region3: #{tpu_custom_call.1} parent=1 // loop_header
      %s22 = sphi 0, %s26
      %p23 = scmp.ge.s32.totalorder %s22, 4
      %s32 = sphi 0, %s34
      %s35 = sphi 0, %s32
      %s36 = sphi 0, %s35
      %s52 = sphi 0, %s36
      %s56 = sphi 0, %s56
      %s58 = sphi 0, %s56
      %s59 = sphi 0, %s58
      %s73 = sphi 0, %s59
      %s77 = sphi 0, %s77
      %s79 = sphi 0, %s77
      %s80 = sphi 0, %s79
      %s94 = sphi 0, %s80
      %s98 = sphi 0, %s98
      %s100 = sphi 0, %s98
      %s101 = sphi 0, %s100
      %s115 = sphi 0, %s101
      %s119 = sphi 0, %s119
      %s121 = sphi 0, %s119
      %s122 = sphi 0, %s121
      %s136 = sphi 0, %s122
      %s140 = sphi 0, %s140
      %s142 = sphi 0, %s140
      %s143 = sphi 0, %s142
      %s157 = sphi 0, %s143
      %s163 = sphi 0, %s165
      %s166 = sphi 0, %s163
      %s167 = sphi 0, %s166
      %s183 = sphi 0, %s167
      %s189 = sphi 0, %s191
      %s192 = sphi 0, %s189
      %s193 = sphi 0, %s192
      %s209 = sphi 0, %s193
      %s215 = sphi 0, %s217
      %s218 = sphi 0, %s215
      %s219 = sphi 0, %s218
      %s235 = sphi 0, %s219
    $region4: #{tpu_custom_call.1} parent=1 // loop_header_branch
      %25 = sbr.rel (%p23) target = $region8
    $region5: #{tpu_custom_call.1} parent=1 // loop_body
      %s27 = ssub.s32 %s22, 1
      %s28 = ssub.s32 %s22, 2
      %s29 = sadd.s32 %s22, 1
      %s30 = ssub.s32 %s22, %s29
      %p31 = scmp.eq.s32.totalorder %s30, 0
      %s33 = sadd.s32 %s32, 1
      %s34 = scalar_select %p31, %s32, %s33
      %p37 = pneg %p31
      %p38 = scmp.eq.s32.totalorder %s22, 1
      %p39 = por %p37, %p38
      %p40 = scmp.ne.s32.totalorder %s32, %s35
      %p41 = scmp.eq.s32.totalorder %s22, 0
      %p42 = por %p40, %p41
      %p43 = scmp.ne.s32.totalorder %s32, %s35
      %p44 = scmp.eq.s32.totalorder %s27, 1
      %p45 = por %p43, %p44
      %p46 = scmp.ne.s32.totalorder %s35, %s36
      %p47 = scmp.eq.s32.totalorder %s27, 0
      %p48 = por %p46, %p47
      %p49 = scmp.ne.s32.totalorder %s35, %s36
      %p50 = scmp.eq.s32.totalorder %s28, 1
      %p51 = por %p49, %p50
      %p53 = scmp.ne.s32.totalorder %s36, %s52
      %p54 = scmp.eq.s32.totalorder %s28, 0
      %p55 = por %p53, %p54
      %s57 = sadd.s32 %s56, 1
      %p60 = scmp.eq.s32.totalorder %s22, 1
      %p61 = scmp.ne.s32.totalorder %s56, %s58
      %p62 = scmp.eq.s32.totalorder %s22, 0
      %p63 = por %p61, %p62
      %p64 = scmp.ne.s32.totalorder %s56, %s58
      %p65 = scmp.eq.s32.totalorder %s27, 1
      %p66 = por %p64, %p65
      %p67 = scmp.ne.s32.totalorder %s58, %s59
      %p68 = scmp.eq.s32.totalorder %s27, 0
      %p69 = por %p67, %p68
      %p70 = scmp.ne.s32.totalorder %s58, %s59
      %p71 = scmp.eq.s32.totalorder %s28, 1
      %p72 = por %p70, %p71
      %p74 = scmp.ne.s32.totalorder %s59, %s73
      %p75 = scmp.eq.s32.totalorder %s28, 0
      %p76 = por %p74, %p75
      %s78 = sadd.s32 %s77, 1
      %p81 = scmp.eq.s32.totalorder %s22, 1
      %p82 = scmp.ne.s32.totalorder %s77, %s79
      %p83 = scmp.eq.s32.totalorder %s22, 0
      %p84 = por %p82, %p83
      %p85 = scmp.ne.s32.totalorder %s77, %s79
      %p86 = scmp.eq.s32.totalorder %s27, 1
      %p87 = por %p85, %p86
      %p88 = scmp.ne.s32.totalorder %s79, %s80
      %p89 = scmp.eq.s32.totalorder %s27, 0
      %p90 = por %p88, %p89
      %p91 = scmp.ne.s32.totalorder %s79, %s80
      %p92 = scmp.eq.s32.totalorder %s28, 1
      %p93 = por %p91, %p92
      %p95 = scmp.ne.s32.totalorder %s80, %s94
      %p96 = scmp.eq.s32.totalorder %s28, 0
      %p97 = por %p95, %p96
      %s99 = sadd.s32 %s98, 1
      %p102 = scmp.eq.s32.totalorder %s22, 1
      %p103 = scmp.ne.s32.totalorder %s98, %s100
      %p104 = scmp.eq.s32.totalorder %s22, 0
      %p105 = por %p103, %p104
      %p106 = scmp.ne.s32.totalorder %s98, %s100
      %p107 = scmp.eq.s32.totalorder %s27, 1
      %p108 = por %p106, %p107
      %p109 = scmp.ne.s32.totalorder %s100, %s101
      %p110 = scmp.eq.s32.totalorder %s27, 0
      %p111 = por %p109, %p110
      %p112 = scmp.ne.s32.totalorder %s100, %s101
      %p113 = scmp.eq.s32.totalorder %s28, 1
      %p114 = por %p112, %p113
      %p116 = scmp.ne.s32.totalorder %s101, %s115
      %p117 = scmp.eq.s32.totalorder %s28, 0
      %p118 = por %p116, %p117
      %s120 = sadd.s32 %s119, 1
      %p123 = scmp.eq.s32.totalorder %s22, 1
      %p124 = scmp.ne.s32.totalorder %s119, %s121
      %p125 = scmp.eq.s32.totalorder %s22, 0
      %p126 = por %p124, %p125
      %p127 = scmp.ne.s32.totalorder %s119, %s121
      %p128 = scmp.eq.s32.totalorder %s27, 1
      %p129 = por %p127, %p128
      %p130 = scmp.ne.s32.totalorder %s121, %s122
      %p131 = scmp.eq.s32.totalorder %s27, 0
      %p132 = por %p130, %p131
      %p133 = scmp.ne.s32.totalorder %s121, %s122
      %p134 = scmp.eq.s32.totalorder %s28, 1
      %p135 = por %p133, %p134
      %p137 = scmp.ne.s32.totalorder %s122, %s136
      %p138 = scmp.eq.s32.totalorder %s28, 0
      %p139 = por %p137, %p138
      %s141 = sadd.s32 %s140, 1
      %p144 = scmp.eq.s32.totalorder %s22, 1
      %p145 = scmp.ne.s32.totalorder %s140, %s142
      %p146 = scmp.eq.s32.totalorder %s22, 0
      %p147 = por %p145, %p146
      %p148 = scmp.ne.s32.totalorder %s140, %s142
      %p149 = scmp.eq.s32.totalorder %s27, 1
      %p150 = por %p148, %p149
      %p151 = scmp.ne.s32.totalorder %s142, %s143
      %p152 = scmp.eq.s32.totalorder %s27, 0
      %p153 = por %p151, %p152
      %p154 = scmp.ne.s32.totalorder %s142, %s143
      %p155 = scmp.eq.s32.totalorder %s28, 1
      %p156 = por %p154, %p155
      %p158 = scmp.ne.s32.totalorder %s143, %s157
      %p159 = scmp.eq.s32.totalorder %s28, 0
      %p160 = por %p158, %p159
      %s161 = ssub.s32 %s22, %s29
      %p162 = scmp.eq.s32.totalorder %s161, 0
      %s164 = sadd.s32 %s163, 1
      %s165 = scalar_select %p162, %s163, %s164
      %p168 = pneg %p162
      %p169 = scmp.eq.s32.totalorder %s22, 1
      %p170 = por %p168, %p169
      %p171 = scmp.ne.s32.totalorder %s163, %s166
      %p172 = scmp.eq.s32.totalorder %s22, 0
      %p173 = por %p171, %p172
      %p174 = scmp.ne.s32.totalorder %s163, %s166
      %p175 = scmp.eq.s32.totalorder %s27, 1
      %p176 = por %p174, %p175
      %p177 = scmp.ne.s32.totalorder %s166, %s167
      %p178 = scmp.eq.s32.totalorder %s27, 0
      %p179 = por %p177, %p178
      %p180 = scmp.ne.s32.totalorder %s166, %s167
      %p181 = scmp.eq.s32.totalorder %s28, 1
      %p182 = por %p180, %p181
      %p184 = scmp.ne.s32.totalorder %s167, %s183
      %p185 = scmp.eq.s32.totalorder %s28, 0
      %p186 = por %p184, %p185
      %s187 = ssub.s32 %s22, %s29
      %p188 = scmp.eq.s32.totalorder %s187, 0
      %s190 = sadd.s32 %s189, 1
      %s191 = scalar_select %p188, %s189, %s190
      %p194 = pneg %p188
      %p195 = scmp.eq.s32.totalorder %s22, 1
      %p196 = por %p194, %p195
      %p197 = scmp.ne.s32.totalorder %s189, %s192
      %p198 = scmp.eq.s32.totalorder %s22, 0
      %p199 = por %p197, %p198
      %p200 = scmp.ne.s32.totalorder %s189, %s192
      %p201 = scmp.eq.s32.totalorder %s27, 1
      %p202 = por %p200, %p201
      %p203 = scmp.ne.s32.totalorder %s192, %s193
      %p204 = scmp.eq.s32.totalorder %s27, 0
      %p205 = por %p203, %p204
      %p206 = scmp.ne.s32.totalorder %s192, %s193
      %p207 = scmp.eq.s32.totalorder %s28, 1
      %p208 = por %p206, %p207
      %p210 = scmp.ne.s32.totalorder %s193, %s209
      %p211 = scmp.eq.s32.totalorder %s28, 0
      %p212 = por %p210, %p211
      %s213 = ssub.s32 %s22, %s29
      %p214 = scmp.eq.s32.totalorder %s213, 0
      %s216 = sadd.s32 %s215, 1
      %s217 = scalar_select %p214, %s215, %s216
      %p220 = pneg %p214
      %p221 = scmp.eq.s32.totalorder %s22, 1
      %p222 = por %p220, %p221
      %p223 = scmp.ne.s32.totalorder %s215, %s218
      %p224 = scmp.eq.s32.totalorder %s22, 0
      %p225 = por %p223, %p224
      %p226 = scmp.ne.s32.totalorder %s215, %s218
      %p227 = scmp.eq.s32.totalorder %s27, 1
      %p228 = por %p226, %p227
      %p229 = scmp.ne.s32.totalorder %s218, %s219
      %p230 = scmp.eq.s32.totalorder %s27, 0
      %p231 = por %p229, %p230
      %p232 = scmp.ne.s32.totalorder %s218, %s219
      %p233 = scmp.eq.s32.totalorder %s28, 1
      %p234 = por %p232, %p233
      %p236 = scmp.ne.s32.totalorder %s219, %s235
      %p237 = scmp.eq.s32.totalorder %s28, 0
      %p238 = por %p236, %p237
      %p239 = scmp.le.s32.totalorder 1, %s22
      %p240 = scmp.lt.s32.totalorder %s22, 3
      %p241 = pnand %p239, %p240
      %p242 = pneg %p241
      // Predicated region
      $region9: #{tpu_custom_call.1} parent=5 // pred_check
        _
      $region10: #{tpu_custom_call.1} parent=5 // pred_check_branch
        %244 = sbr.rel (%p241) target = $region12
      $region11: #{tpu_custom_call.1} parent=5 // pred_region
        %s245 = ssub.s32 %s22, 1
        // Predicated region
        $region13: #{tpu_custom_call.1} parent=11 // pred_check
          %p246 = pneg %p69
        $region14: #{tpu_custom_call.1} parent=11 // pred_check_branch
          %248 = sbr.rel (%p246) target = $region16
        $region15: #{tpu_custom_call.1} parent=11 // pred_region
          _
        $region16: #{tpu_custom_call.1} parent=11 // pred_fallthru
          _
        // Predicated region
        $region17: #{tpu_custom_call.1} parent=11 // pred_check
          %p249 = pneg %p90
        $region18: #{tpu_custom_call.1} parent=11 // pred_check_branch
          %251 = sbr.rel (%p249) target = $region20
        $region19: #{tpu_custom_call.1} parent=11 // pred_region
          _
        $region20: #{tpu_custom_call.1} parent=11 // pred_fallthru
          _
        // Predicated region
        $region21: #{tpu_custom_call.1} parent=11 // pred_check
          %p252 = pneg %p111
        $region22: #{tpu_custom_call.1} parent=11 // pred_check_branch
          %254 = sbr.rel (%p252) target = $region24
        $region23: #{tpu_custom_call.1} parent=11 // pred_region
          %s256 = ssub.s32 6144, 6144
          %257 = vsyncadd [#allocation3], %s256
          %s258 = sshll.u32 [#allocation2], 4
          %s259 = int_to_ptr.vmem [resolvable:$true] %s258
          %264 = dma.hbm_to_vmem [thread:$0]  %s3, 6144, %s259, [#allocation3], 128, 128, 8
        $region24: #{tpu_custom_call.1} parent=11 // pred_fallthru
          _
        // Predicated region
        $region25: #{tpu_custom_call.1} parent=11 // pred_check
          %p265 = pneg %p132
        $region26: #{tpu_custom_call.1} parent=11 // pred_check_branch
          %267 = sbr.rel (%p265) target = $region28
        $region27: #{tpu_custom_call.1} parent=11 // pred_region
          _
        $region28: #{tpu_custom_call.1} parent=11 // pred_fallthru
          _
        // Predicated region
        $region29: #{tpu_custom_call.1} parent=11 // pred_check
          %p268 = pneg %p153
        $region30: #{tpu_custom_call.1} parent=11 // pred_check_branch
          %270 = sbr.rel (%p268) target = $region32
        $region31: #{tpu_custom_call.1} parent=11 // pred_region
          _
        $region32: #{tpu_custom_call.1} parent=11 // pred_fallthru
          _
      $region12: #{tpu_custom_call.1} parent=5 // pred_fallthru
        _
      %p271 = scmp.lt.s32.totalorder %s22, 2
      // Predicated region
      $region33: #{tpu_custom_call.1} parent=5 // pred_check
        %p272 = pneg %p271
      $region34: #{tpu_custom_call.1} parent=5 // pred_check_branch
        %274 = sbr.rel (%p272) target = $region36
      $region35: #{tpu_custom_call.1} parent=5 // pred_region
        // Predicated region
        $region37: #{tpu_custom_call.1} parent=35 // pred_check
          %p275 = pneg %p42
        $region38: #{tpu_custom_call.1} parent=35 // pred_check_branch
          %277 = sbr.rel (%p275) target = $region40
        $region39: #{tpu_custom_call.1} parent=35 // pred_region
          %s278 = smul.u32 8, %s22
          %p279 = scmp.lt.s32.totalorder %s278, 15
          %s280 = scalar_select %p279, %s278, 15
          %s281 = smul.addr %s280, 8
          %s282 = scalar_lea.vmem %s0, %s281
          %s283 = smul.u32 8, %s22
        $region40: #{tpu_custom_call.1} parent=35 // pred_fallthru
          _
      $region36: #{tpu_custom_call.1} parent=5 // pred_fallthru
        _
      %p284 = scmp.le.s32.totalorder 1, %s22
      %p285 = scmp.lt.s32.totalorder %s22, 3
      %p286 = pnand %p284, %p285
      %p287 = pneg %p286
      // Predicated region
      $region41: #{tpu_custom_call.1} parent=5 // pred_check
        _
      $region42: #{tpu_custom_call.1} parent=5 // pred_check_branch
        %289 = sbr.rel (%p286) target = $region44
      $region43: #{tpu_custom_call.1} parent=5 // pred_region
        %s290 = ssub.s32 %s22, 1
        // Predicated region
        $region45: #{tpu_custom_call.1} parent=43 // pred_check
          %p291 = pneg %p111
        $region46: #{tpu_custom_call.1} parent=43 // pred_check_branch
          %293 = sbr.rel (%p291) target = $region48
        $region47: #{tpu_custom_call.1} parent=43 // pred_region
          %294 = dma.done [#allocation3], 6144
        $region48: #{tpu_custom_call.1} parent=43 // pred_fallthru
          _
        %s295 = smul.u32 8, %s27
        %p296 = scmp.lt.s32.totalorder %s295, 15
        %s297 = scalar_select %p296, %s295, 15
        %s298 = smul.addr %s297, 8
        %s299 = scalar_lea.vmem %s0, %s298
        %p300 = pneg %p48
        %p301 = pneg %p45
        %p302 = pneg %p69
        %p303 = pneg %p66
        %p304 = pneg %p90
        %p305 = pneg %p87
        %p306 = pneg %p111
        %p307 = pneg %p108
        %p308 = pneg %p132
        %p309 = pneg %p129
        %p310 = pneg %p153
        %p311 = pneg %p150
        %p312 = pneg %p179
        %p313 = pneg %p176
        %s314 = sand.u32 %s166, 1
        %s315 = scalar_lea.sflag [#allocation4], %s314
        %s316 = sand.u32 %s166, 1
        %s317 = smul.addr %s316, 64
        %s318 = scalar_lea.vmem [#allocation5], %s317
        %p319 = pneg %p205
        %p320 = pneg %p202
        %s321 = sand.u32 %s27, 1
        %s322 = scalar_lea.sflag [#allocation7], %s321
        %s323 = sand.u32 %s192, 1
        %s324 = smul.addr %s323, 64
        %s325 = scalar_lea.vmem [#allocation6], %s324
        %p326 = pneg %p231
        %p327 = pneg %p228
        %s328 = sand.u32 %s27, 1
        %s329 = scalar_lea.sflag [#allocation7], %s328
        %s330 = sand.u32 %s218, 1
        %s331 = smul.addr %s330, 64
        %s332 = scalar_lea.vmem [#allocation8], %s331
        %s333 = smul.u32 8, %s27
        %p334 = scmp.lt.s32.totalorder %s333, 15
        %s335 = scalar_select %p334, %s333, 15
        %s336 = smul.addr %s335, 8
        %s337 = scalar_lea.vmem %s0, %s336
        %s338 = smul.u32 8, %s27
        %s339 = smul.u32 8, %s27
        %s340 = smul.u32 8, %s27
        %s341 = smul.u32 8, %s27
        %v342 = vlaneseq
        %v343 = vand.u32 %v342, 127
        %vm344 = vcmp.lt.s32.totalorder %v343, 32
        %v345 = vsel %vm344, 1, 0
        %v346 = vcvt.s32.f32 %v345
        %v347 = vld [vmem:[%s337] sm:$0xff]
        %v348 = vld [vmem:[%s337 + $0x8] sm:$0xff]
        %v349 = vld [vmem:[%s337 + $0x10] sm:$0xff]
        %v350 = vld [vmem:[%s337 + $0x18] sm:$0xff]
        %v351 = vld [vmem:[%s337 + $0x20] sm:$0xff]
        %v352 = vld [vmem:[%s337 + $0x28] sm:$0xff]
        %v353 = vld [vmem:[%s337 + $0x30] sm:$0xff]
        %v354 = vld [vmem:[%s337 + $0x38] sm:$0xff]
        %v355 = vld [vmem:[%s2] sm:$0x7]
        %v356 = vld [vmem:[%s1] sm:$0xff]
        %v357 = vld [vmem:[%s1 + $0x8] sm:$0xff]
        %v358 = vlaneseq
        %v359 = vshrl.u32 %v358, 7
        %v360 = vsub.s32 0, %v359
        %v361 = vrot.slane %v355, %v360
        %vm362 = vcmask 130048
        %v364 = vsel %vm362, %v347, 0
        %v367 = vsel %vm362, %v348, 0
        %v370 = vsel %vm362, %v349, 0
        %v373 = vsel %vm362, %v350, 0
        %v376 = vsel %vm362, %v351, 0
        %v379 = vsel %vm362, %v352, 0
        %v382 = vsel %vm362, %v353, 0
        %v385 = vsel %vm362, %v354, 0
        %387 = vmatprep.subr.mxu0 0.0
        %388 = vmatpush1.msra.mxu0 %v356
        %389 = vmatprep.subr.mxu0 0.0
        %390 = vmatpush1.msra.mxu0 %v357
        %391 = vmatprep.subr.mxu0 0.0
        %392 = vmatpush1.msra.mxu0 0.0
        %393 = vmatprep.subr.mxu0 0.0
        %394 = vmatpush1.msra.mxu0 0.0
        %395 = vmatprep.subr.mxu0 0.0
        %396 = vmatpush1.msra.mxu0 0.0
        %397 = vmatprep.subr.mxu0 0.0
        %398 = vmatpush1.msra.mxu0 0.0
        %399 = vmatprep.subr.mxu0 0.0
        %400 = vmatpush1.msra.mxu0 0.0
        %401 = vmatprep.subr.mxu0 0.0
        %402 = vmatpush1.msra.mxu0 0.0
        %403 = vmatprep.subr.mxu0 0.0
        %404 = vmatpush1.msra.mxu0 0.0
        %405 = vmatprep.subr.mxu0 0.0
        %406 = vmatpush1.msra.mxu0 0.0
        %407 = vmatprep.subr.mxu0 0.0
        %408 = vmatpush1.msra.mxu0 0.0
        %409 = vmatprep.subr.mxu0 0.0
        %410 = vmatpush1.msra.mxu0 0.0
        %411 = vmatprep.subr.mxu0 0.0
        %412 = vmatpush1.msra.mxu0 0.0
        %413 = vmatprep.subr.mxu0 0.0
        %414 = vmatpush1.msra.mxu0 0.0
        %415 = vmatprep.subr.mxu0 0.0
        %416 = vmatpush1.msra.mxu0 0.0
        %417 = vmatprep.subr.mxu0 0.0
        %418 = vmatpush1.msra.mxu0 0.0
        %419 = vmatprep.subr.mxu0 0.0
        %420 = vmatpush1.msra.mxu0 0.0
        %421 = vmatprep.subr.mxu0 0.0
        %422 = vmatpush1.msra.mxu0 0.0
        %423 = vmatprep.subr.mxu0 0.0
        %424 = vmatpush1.msra.mxu0 0.0
        %425 = vmatprep.subr.mxu0 0.0
        %426 = vmatpush1.msra.mxu0 0.0
        %427 = vmatprep.subr.mxu0 0.0
        %428 = vmatpush1.msra.mxu0 0.0
        %429 = vmatprep.subr.mxu0 0.0
        %430 = vmatpush1.msra.mxu0 0.0
        %431 = vmatprep.subr.mxu0 0.0
        %432 = vmatpush1.msra.mxu0 0.0
        %433 = vmatprep.subr.mxu0 0.0
        %434 = vmatpush1.msra.mxu0 0.0
        %435 = vmatprep.subr.mxu0 0.0
        %436 = vmatpush1.msra.mxu0 0.0
        %437 = vmatprep.subr.mxu0 0.0
        %438 = vmatpush1.msra.mxu0 0.0
        %439 = vmatprep.subr.mxu0 0.0
        %440 = vmatpush1.msra.mxu0 0.0
        %441 = vmatprep.subr.mxu0 0.0
        %442 = vmatpush1.msra.mxu0 0.0
        %443 = vmatprep.subr.mxu0 0.0
        %444 = vmatpush1.msra.mxu0 0.0
        %445 = vmatprep.subr.mxu0 0.0
        %446 = vmatpush1.msra.mxu0 0.0
        %447 = vmatprep.subr.mxu0 0.0
        %448 = vmatpush1.msra.mxu0 0.0
        %449 = vmatprep.subr.mxu0 0.0
        %450 = vmatpush1.msra.mxu0 0.0
        %451 = vmatprep.mubr.f32.mxu0 0.0
        %452 = vmatmul.mubr.f32.gmra.mrb[0].mxu0 %v364
        %v453 = vpop.f32.mrb[0].mxu0
        %v454 = vadd.f32 %v361, %v453
        %v455 = vpop.f32.mrb[0].mxu0
        %456 = vmatprep.mubr.f32.mxu0 0.0
        %457 = vmatmul.mubr.f32.gmra.mrb[0].mxu0 %v367
        %v458 = vpop.f32.mrb[0].mxu0
        %v459 = vadd.f32 %v361, %v458
        %v460 = vpop.f32.mrb[0].mxu0
        %461 = vmatprep.mubr.f32.mxu0 0.0
        %462 = vmatmul.mubr.f32.gmra.mrb[0].mxu0 %v370
        %v463 = vpop.f32.mrb[0].mxu0
        %v464 = vadd.f32 %v361, %v463
        %v465 = vpop.f32.mrb[0].mxu0
        %466 = vmatprep.mubr.f32.mxu0 0.0
        %467 = vmatmul.mubr.f32.gmra.mrb[0].mxu0 %v373
        %v468 = vpop.f32.mrb[0].mxu0
        %v469 = vadd.f32 %v361, %v468
        %v470 = vpop.f32.mrb[0].mxu0
        %471 = vmatprep.mubr.f32.mxu0 0.0
        %472 = vmatmul.mubr.f32.gmra.mrb[0].mxu0 %v376
        %v473 = vpop.f32.mrb[0].mxu0
        %v474 = vadd.f32 %v361, %v473
        %v475 = vpop.f32.mrb[0].mxu0
        %476 = vmatprep.mubr.f32.mxu0 0.0
        %477 = vmatmul.mubr.f32.gmra.mrb[0].mxu0 %v379
        %v478 = vpop.f32.mrb[0].mxu0
        %v479 = vadd.f32 %v361, %v478
        %v480 = vpop.f32.mrb[0].mxu0
        %481 = vmatprep.mubr.f32.mxu0 0.0
        %482 = vmatmul.mubr.f32.gmra.mrb[0].mxu0 %v382
        %v483 = vpop.f32.mrb[0].mxu0
        %v484 = vadd.f32 %v361, %v483
        %v485 = vpop.f32.mrb[0].mxu0
        %486 = vmatprep.mubr.f32.mxu0 0.0
        %487 = vmatmul.mubr.f32.gmra.mrb[0].mxu0 %v385
        %v488 = vpop.f32.mrb[0].mxu0
        %v489 = vadd.f32 %v361, %v488
        %v490 = vpop.f32.mrb[0].mxu0
        %491 = vdwg.mxu0
        %492 = vadd.xlane.f32.xlu0 %v454
        %v493 = vpop.xlane.xlu0 %492
        %494 = vadd.xlane.f32.xlu0 %v459
        %v495 = vpop.xlane.xlu0 %494
        %496 = vadd.xlane.f32.xlu0 %v464
        %v497 = vpop.xlane.xlu0 %496
        %498 = vadd.xlane.f32.xlu0 %v469
        %v499 = vpop.xlane.xlu0 %498
        %500 = vadd.xlane.f32.xlu0 %v474
        %v501 = vpop.xlane.xlu0 %500
        %502 = vadd.xlane.f32.xlu0 %v479
        %v503 = vpop.xlane.xlu0 %502
        %504 = vadd.xlane.f32.xlu0 %v484
        %v505 = vpop.xlane.xlu0 %504
        %506 = vadd.xlane.f32.xlu0 %v489
        %v507 = vpop.xlane.xlu0 %506
        %v508 = vmul.f32 %v493, 0.03125
        %v509 = vmul.f32 %v495, 0.03125
        %v510 = vmul.f32 %v497, 0.03125
        %v511 = vmul.f32 %v499, 0.03125
        %v512 = vmul.f32 %v501, 0.03125
        %v513 = vmul.f32 %v503, 0.03125
        %v514 = vmul.f32 %v505, 0.03125
        %v515 = vmul.f32 %v507, 0.03125
        %v516 = vsub.f32 %v454, %v508
        %v517 = vsub.f32 %v459, %v509
        %v518 = vsub.f32 %v464, %v510
        %v519 = vsub.f32 %v469, %v511
        %v520 = vsub.f32 %v474, %v512
        %v521 = vsub.f32 %v479, %v513
        %v522 = vsub.f32 %v484, %v514
        %v523 = vsub.f32 %v489, %v515
        %v524 = vmul.f32 %v516, %v346
        %v525 = vmul.f32 %v517, %v346
        %v526 = vmul.f32 %v518, %v346
        %v527 = vmul.f32 %v519, %v346
        %v528 = vmul.f32 %v520, %v346
        %v529 = vmul.f32 %v521, %v346
        %v530 = vmul.f32 %v522, %v346
        %v531 = vmul.f32 %v523, %v346
        %v532 = vmul.f32 %v524, %v524
        %v533 = vmul.f32 %v525, %v525
        %v534 = vmul.f32 %v526, %v526
        %v535 = vmul.f32 %v527, %v527
        %v536 = vmul.f32 %v528, %v528
        %v537 = vmul.f32 %v529, %v529
        %v538 = vmul.f32 %v530, %v530
        %v539 = vmul.f32 %v531, %v531
        %540 = vadd.xlane.f32.xlu0 %v532
        %v541 = vpop.xlane.xlu0 %540
        %542 = vadd.xlane.f32.xlu0 %v533
        %v543 = vpop.xlane.xlu0 %542
        %544 = vadd.xlane.f32.xlu0 %v534
        %v545 = vpop.xlane.xlu0 %544
        %546 = vadd.xlane.f32.xlu0 %v535
        %v547 = vpop.xlane.xlu0 %546
        %548 = vadd.xlane.f32.xlu0 %v536
        %v549 = vpop.xlane.xlu0 %548
        %550 = vadd.xlane.f32.xlu0 %v537
        %v551 = vpop.xlane.xlu0 %550
        %552 = vadd.xlane.f32.xlu0 %v538
        %v553 = vpop.xlane.xlu0 %552
        %554 = vadd.xlane.f32.xlu0 %v539
        %v555 = vpop.xlane.xlu0 %554
        %v556 = vmul.f32 %v541, 0.03125
        %v557 = vmul.f32 %v543, 0.03125
        %v558 = vmul.f32 %v545, 0.03125
        %v559 = vmul.f32 %v547, 0.03125
        %v560 = vmul.f32 %v549, 0.03125
        %v561 = vmul.f32 %v551, 0.03125
        %v562 = vmul.f32 %v553, 0.03125
        %v563 = vmul.f32 %v555, 0.03125
        %v564 = vadd.f32 %v556, 1e-05
        %v565 = vadd.f32 %v557, 1e-05
        %v566 = vadd.f32 %v558, 1e-05
        %v567 = vadd.f32 %v559, 1e-05
        %v568 = vadd.f32 %v560, 1e-05
        %v569 = vadd.f32 %v561, 1e-05
        %v570 = vadd.f32 %v562, 1e-05
        %v571 = vadd.f32 %v563, 1e-05
        %v572 = vrsqrt.pop %v564
        %v573 = vrsqrt.pop %v565
        %v574 = vrsqrt.pop %v566
        %v575 = vrsqrt.pop %v567
        %v576 = vrsqrt.pop %v568
        %v577 = vrsqrt.pop %v569
        %v578 = vrsqrt.pop %v570
        %v579 = vrsqrt.pop %v571
        %v580 = vmul.f32 %v524, %v572
        %v581 = vmul.f32 %v525, %v573
        %v582 = vmul.f32 %v526, %v574
        %v583 = vmul.f32 %v527, %v575
        %v584 = vmul.f32 %v528, %v576
        %v585 = vmul.f32 %v529, %v577
        %v586 = vmul.f32 %v530, %v578
        %v587 = vmul.f32 %v531, %v579
        %v588 = vlaneseq
        %v589 = vshrl.u32 %v588, 7
        %v590 = vsub.s32 1, %v589
        %v591 = vrot.slane %v355, %v590
        %v592 = vmul.f32 %v580, %v591
        %v593 = vmul.f32 %v581, %v591
        %v594 = vmul.f32 %v582, %v591
        %v595 = vmul.f32 %v583, %v591
        %v596 = vmul.f32 %v584, %v591
        %v597 = vmul.f32 %v585, %v591
        %v598 = vmul.f32 %v586, %v591
        %v599 = vmul.f32 %v587, %v591
        %v600 = vlaneseq
        %v601 = vshrl.u32 %v600, 7
        %v602 = vsub.s32 2, %v601
        %v603 = vrot.slane %v355, %v602
        %v604 = vadd.f32 %v592, %v603
        %v605 = vadd.f32 %v593, %v603
        %v606 = vadd.f32 %v594, %v603
        %v607 = vadd.f32 %v595, %v603
        %v608 = vadd.f32 %v596, %v603
        %v609 = vadd.f32 %v597, %v603
        %v610 = vadd.f32 %v598, %v603
        %v611 = vadd.f32 %v599, %v603
        %v612 = vmax.f32 %v604, 0.0
        %v613 = vmax.f32 %v605, 0.0
        %v614 = vmax.f32 %v606, 0.0
        %v615 = vmax.f32 %v607, 0.0
        %v616 = vmax.f32 %v608, 0.0
        %v617 = vmax.f32 %v609, 0.0
        %v618 = vmax.f32 %v610, 0.0
        %v619 = vmax.f32 %v611, 0.0
        %v620 = vld [vmem:[%s4] sm:$0xff]
        %v621 = vld [vmem:[%s4 + $0x8] sm:$0xff]
        %v622 = vld [vmem:[%s4 + $0x10] sm:$0xff]
        %v623 = vld [vmem:[%s4 + $0x18] sm:$0xff]
        %v624 = vld [vmem:[%s4 + $0x20] sm:$0xff]
        %v625 = vld [vmem:[%s4 + $0x28] sm:$0xff]
        %626 = vmatprep.subr.mxu0 %v621
        %627 = vmatpush1.msra.mxu0 %v620
        %628 = vmatprep.subr.mxu0 %v624
        %629 = vmatpush1.msra.mxu0 %v623
        %630 = vmatprep.subr.mxu0 0.0
        %631 = vmatpush1.msra.mxu0 0.0
        %632 = vmatprep.subr.mxu0 0.0
        %633 = vmatpush1.msra.mxu0 0.0
        %634 = vmatprep.subr.mxu0 0.0
        %635 = vmatpush1.msra.mxu0 0.0
        %636 = vmatprep.subr.mxu0 0.0
        %637 = vmatpush1.msra.mxu0 0.0
        %638 = vmatprep.subr.mxu0 0.0
        %639 = vmatpush1.msra.mxu0 0.0
        %640 = vmatprep.subr.mxu0 0.0
        %641 = vmatpush1.msra.mxu0 0.0
        %642 = vmatprep.subr.mxu0 0.0
        %643 = vmatpush1.msra.mxu0 0.0
        %644 = vmatprep.subr.mxu0 0.0
        %645 = vmatpush1.msra.mxu0 0.0
        %646 = vmatprep.subr.mxu0 0.0
        %647 = vmatpush1.msra.mxu0 0.0
        %648 = vmatprep.subr.mxu0 0.0
        %649 = vmatpush1.msra.mxu0 0.0
        %650 = vmatprep.subr.mxu0 0.0
        %651 = vmatpush1.msra.mxu0 0.0
        %652 = vmatprep.subr.mxu0 0.0
        %653 = vmatpush1.msra.mxu0 0.0
        %654 = vmatprep.subr.mxu0 0.0
        %655 = vmatpush1.msra.mxu0 0.0
        %656 = vmatprep.subr.mxu0 0.0
        %657 = vmatpush1.msra.mxu0 0.0
        %658 = vmatprep.subr.mxu0 0.0
        %659 = vmatpush1.msra.mxu0 0.0
        %660 = vmatprep.subr.mxu0 0.0
        %661 = vmatpush1.msra.mxu0 0.0
        %662 = vmatprep.subr.mxu0 0.0
        %663 = vmatpush1.msra.mxu0 0.0
        %664 = vmatprep.subr.mxu0 0.0
        %665 = vmatpush1.msra.mxu0 0.0
        %666 = vmatprep.subr.mxu0 0.0
        %667 = vmatpush1.msra.mxu0 0.0
        %668 = vmatprep.subr.mxu0 0.0
        %669 = vmatpush1.msra.mxu0 0.0
        %670 = vmatprep.subr.mxu0 0.0
        %671 = vmatpush1.msra.mxu0 0.0
        %672 = vmatprep.subr.mxu0 0.0
        %673 = vmatpush1.msra.mxu0 0.0
        %674 = vmatprep.subr.mxu0 0.0
        %675 = vmatpush1.msra.mxu0 0.0
        %676 = vmatprep.subr.mxu0 0.0
        %677 = vmatpush1.msra.mxu0 0.0
        %678 = vmatprep.subr.mxu0 0.0
        %679 = vmatpush1.msra.mxu0 0.0
        %680 = vmatprep.subr.mxu0 0.0
        %681 = vmatpush1.msra.mxu0 0.0
        %682 = vmatprep.subr.mxu0 0.0
        %683 = vmatpush1.msra.mxu0 0.0
        %684 = vmatprep.subr.mxu0 0.0
        %685 = vmatpush1.msra.mxu0 0.0
        %686 = vmatprep.subr.mxu0 0.0
        %687 = vmatpush1.msra.mxu0 0.0
        %688 = vmatprep.subr.mxu0 0.0
        %689 = vmatpush1.msra.mxu0 0.0
        %690 = vmatprep.mubr.f32.mxu0 0.0
        %691 = vmatmul.mubr.f32.gmra.mrb[0].mxu0 %v364
        %v692 = vpop.f32.mrb[0].mxu0
        %v693 = vadd.f32 0.0, %v692
        %v694 = vpop.f32.mrb[0].mxu0
        %v695 = vadd.f32 0.0, %v694
        %696 = vmatprep.mubr.f32.mxu0 0.0
        %697 = vmatmul.mubr.f32.gmra.mrb[0].mxu0 %v367
        %v698 = vpop.f32.mrb[0].mxu0
        %v699 = vadd.f32 0.0, %v698
        %v700 = vpop.f32.mrb[0].mxu0
        %v701 = vadd.f32 0.0, %v700
        %702 = vmatprep.mubr.f32.mxu0 0.0
        %703 = vmatmul.mubr.f32.gmra.mrb[0].mxu0 %v370
        %v704 = vpop.f32.mrb[0].mxu0
        %v705 = vadd.f32 0.0, %v704
        %v706 = vpop.f32.mrb[0].mxu0
        %v707 = vadd.f32 0.0, %v706
        %708 = vmatprep.mubr.f32.mxu0 0.0
        %709 = vmatmul.mubr.f32.gmra.mrb[0].mxu0 %v373
        %v710 = vpop.f32.mrb[0].mxu0
        %v711 = vadd.f32 0.0, %v710
        %v712 = vpop.f32.mrb[0].mxu0
        %v713 = vadd.f32 0.0, %v712
        %714 = vmatprep.mubr.f32.mxu0 0.0
        %715 = vmatmul.mubr.f32.gmra.mrb[0].mxu0 %v376
        %v716 = vpop.f32.mrb[0].mxu0
        %v717 = vadd.f32 0.0, %v716
        %v718 = vpop.f32.mrb[0].mxu0
        %v719 = vadd.f32 0.0, %v718
        %720 = vmatprep.mubr.f32.mxu0 0.0
        %721 = vmatmul.mubr.f32.gmra.mrb[0].mxu0 %v379
        %v722 = vpop.f32.mrb[0].mxu0
        %v723 = vadd.f32 0.0, %v722
        %v724 = vpop.f32.mrb[0].mxu0
        %v725 = vadd.f32 0.0, %v724
        %726 = vmatprep.mubr.f32.mxu0 0.0
        %727 = vmatmul.mubr.f32.gmra.mrb[0].mxu0 %v382
        %v728 = vpop.f32.mrb[0].mxu0
        %v729 = vadd.f32 0.0, %v728
        %v730 = vpop.f32.mrb[0].mxu0
        %v731 = vadd.f32 0.0, %v730
        %732 = vmatprep.mubr.f32.mxu0 0.0
        %733 = vmatmul.mubr.f32.gmra.mrb[0].mxu0 %v385
        %v734 = vpop.f32.mrb[0].mxu0
        %v735 = vadd.f32 0.0, %v734
        %v736 = vpop.f32.mrb[0].mxu0
        %v737 = vadd.f32 0.0, %v736
        %738 = vdwg.mxu0
        %739 = vmatprep.subr.mxu0 0.0
        %740 = vmatpush1.msra.mxu0 %v622
        %741 = vmatprep.subr.mxu0 0.0
        %742 = vmatpush1.msra.mxu0 %v625
        %743 = vmatprep.subr.mxu0 0.0
        %744 = vmatpush1.msra.mxu0 0.0
        %745 = vmatprep.subr.mxu0 0.0
        %746 = vmatpush1.msra.mxu0 0.0
        %747 = vmatprep.subr.mxu0 0.0
        %748 = vmatpush1.msra.mxu0 0.0
        %749 = vmatprep.subr.mxu0 0.0
        %750 = vmatpush1.msra.mxu0 0.0
        %751 = vmatprep.subr.mxu0 0.0
        %752 = vmatpush1.msra.mxu0 0.0
        %753 = vmatprep.subr.mxu0 0.0
        %754 = vmatpush1.msra.mxu0 0.0
        %755 = vmatprep.subr.mxu0 0.0
        %756 = vmatpush1.msra.mxu0 0.0
        %757 = vmatprep.subr.mxu0 0.0
        %758 = vmatpush1.msra.mxu0 0.0
        %759 = vmatprep.subr.mxu0 0.0
        %760 = vmatpush1.msra.mxu0 0.0
        %761 = vmatprep.subr.mxu0 0.0
        %762 = vmatpush1.msra.mxu0 0.0
        %763 = vmatprep.subr.mxu0 0.0
        %764 = vmatpush1.msra.mxu0 0.0
        %765 = vmatprep.subr.mxu0 0.0
        %766 = vmatpush1.msra.mxu0 0.0
        %767 = vmatprep.subr.mxu0 0.0
        %768 = vmatpush1.msra.mxu0 0.0
        %769 = vmatprep.subr.mxu0 0.0
        %770 = vmatpush1.msra.mxu0 0.0
        %771 = vmatprep.subr.mxu0 0.0
        %772 = vmatpush1.msra.mxu0 0.0
        %773 = vmatprep.subr.mxu0 0.0
        %774 = vmatpush1.msra.mxu0 0.0
        %775 = vmatprep.subr.mxu0 0.0
        %776 = vmatpush1.msra.mxu0 0.0
        %777 = vmatprep.subr.mxu0 0.0
        %778 = vmatpush1.msra.mxu0 0.0
        %779 = vmatprep.subr.mxu0 0.0
        %780 = vmatpush1.msra.mxu0 0.0
        %781 = vmatprep.subr.mxu0 0.0
        %782 = vmatpush1.msra.mxu0 0.0
        %783 = vmatprep.subr.mxu0 0.0
        %784 = vmatpush1.msra.mxu0 0.0
        %785 = vmatprep.subr.mxu0 0.0
        %786 = vmatpush1.msra.mxu0 0.0
        %787 = vmatprep.subr.mxu0 0.0
        %788 = vmatpush1.msra.mxu0 0.0
        %789 = vmatprep.subr.mxu0 0.0
        %790 = vmatpush1.msra.mxu0 0.0
        %791 = vmatprep.subr.mxu0 0.0
        %792 = vmatpush1.msra.mxu0 0.0
        %793 = vmatprep.subr.mxu0 0.0
        %794 = vmatpush1.msra.mxu0 0.0
        %795 = vmatprep.subr.mxu0 0.0
        %796 = vmatpush1.msra.mxu0 0.0
        %797 = vmatprep.subr.mxu0 0.0
        %798 = vmatpush1.msra.mxu0 0.0
        %799 = vmatprep.subr.mxu0 0.0
        %800 = vmatpush1.msra.mxu0 0.0
        %801 = vmatprep.subr.mxu0 0.0
        %802 = vmatpush1.msra.mxu0 0.0
        %803 = vmatprep.mubr.f32.mxu0 0.0
        %804 = vmatmul.mubr.f32.gmra.mrb[0].mxu0 %v364
        %v805 = vpop.f32.mrb[0].mxu0
        %v806 = vadd.f32 0.0, %v805
        %v807 = vpop.f32.mrb[0].mxu0
        %808 = vmatprep.mubr.f32.mxu0 0.0
        %809 = vmatmul.mubr.f32.gmra.mrb[0].mxu0 %v367
        %v810 = vpop.f32.mrb[0].mxu0
        %v811 = vadd.f32 0.0, %v810
        %v812 = vpop.f32.mrb[0].mxu0
        %813 = vmatprep.mubr.f32.mxu0 0.0
        %814 = vmatmul.mubr.f32.gmra.mrb[0].mxu0 %v370
        %v815 = vpop.f32.mrb[0].mxu0
        %v816 = vadd.f32 0.0, %v815
        %v817 = vpop.f32.mrb[0].mxu0
        %818 = vmatprep.mubr.f32.mxu0 0.0
        %819 = vmatmul.mubr.f32.gmra.mrb[0].mxu0 %v373
        %v820 = vpop.f32.mrb[0].mxu0
        %v821 = vadd.f32 0.0, %v820
        %v822 = vpop.f32.mrb[0].mxu0
        %823 = vmatprep.mubr.f32.mxu0 0.0
        %824 = vmatmul.mubr.f32.gmra.mrb[0].mxu0 %v376
        %v825 = vpop.f32.mrb[0].mxu0
        %v826 = vadd.f32 0.0, %v825
        %v827 = vpop.f32.mrb[0].mxu0
        %828 = vmatprep.mubr.f32.mxu0 0.0
        %829 = vmatmul.mubr.f32.gmra.mrb[0].mxu0 %v379
        %v830 = vpop.f32.mrb[0].mxu0
        %v831 = vadd.f32 0.0, %v830
        %v832 = vpop.f32.mrb[0].mxu0
        %833 = vmatprep.mubr.f32.mxu0 0.0
        %834 = vmatmul.mubr.f32.gmra.mrb[0].mxu0 %v382
        %v835 = vpop.f32.mrb[0].mxu0
        %v836 = vadd.f32 0.0, %v835
        %v837 = vpop.f32.mrb[0].mxu0
        %838 = vmatprep.mubr.f32.mxu0 0.0
        %839 = vmatmul.mubr.f32.gmra.mrb[0].mxu0 %v385
        %v840 = vpop.f32.mrb[0].mxu0
        %v841 = vadd.f32 0.0, %v840
        %v842 = vpop.f32.mrb[0].mxu0
        %843 = vdwg.mxu0
        %v844 = vld [vmem:[%s5] sm:$0x7]
        %v845 = vld [vmem:[#allocation2] sm:$0xff]
        %v846 = vld [vmem:[#allocation2 + $0x8] sm:$0xff]
        %v847 = vld [vmem:[#allocation2 + $0x10] sm:$0xff]
        %v848 = vld [vmem:[#allocation2 + $0x18] sm:$0xff]
        %v849 = vld [vmem:[#allocation2 + $0x20] sm:$0xff]
        %v850 = vld [vmem:[#allocation2 + $0x28] sm:$0xff]
        %v851 = vld [vmem:[#allocation2 + $0x30] sm:$0xff]
        %v852 = vld [vmem:[#allocation2 + $0x38] sm:$0xff]
        %v853 = vld [vmem:[#allocation2 + $0x40] sm:$0xff]
        %v854 = vld [vmem:[#allocation2 + $0x48] sm:$0xff]
        %v855 = vld [vmem:[#allocation2 + $0x50] sm:$0xff]
        %v856 = vld [vmem:[#allocation2 + $0x58] sm:$0xff]
        %v857 = vld [vmem:[#allocation2 + $0x60] sm:$0xff]
        %v858 = vld [vmem:[#allocation2 + $0x68] sm:$0xff]
        %v859 = vld [vmem:[#allocation2 + $0x70] sm:$0xff]
        %v860 = vld [vmem:[#allocation2 + $0x78] sm:$0xff]
        %861 = vmatprep.subr.mxu0 0.0
        %862 = vmatpush1.msra.mxu0 %v845
        %863 = vmatprep.subr.mxu0 0.0
        %864 = vmatpush1.msra.mxu0 %v846
        %865 = vmatprep.subr.mxu0 0.0
        %866 = vmatpush1.msra.mxu0 %v847
        %867 = vmatprep.subr.mxu0 0.0
        %868 = vmatpush1.msra.mxu0 %v848
        %869 = vmatprep.subr.mxu0 0.0
        %870 = vmatpush1.msra.mxu0 %v849
        %871 = vmatprep.subr.mxu0 0.0
        %872 = vmatpush1.msra.mxu0 %v850
        %873 = vmatprep.subr.mxu0 0.0
        %874 = vmatpush1.msra.mxu0 %v851
        %875 = vmatprep.subr.mxu0 0.0
        %876 = vmatpush1.msra.mxu0 %v852
        %877 = vmatprep.subr.mxu0 0.0
        %878 = vmatpush1.msra.mxu0 %v853
        %879 = vmatprep.subr.mxu0 0.0
        %880 = vmatpush1.msra.mxu0 %v854
        %881 = vmatprep.subr.mxu0 0.0
        %882 = vmatpush1.msra.mxu0 %v855
        %883 = vmatprep.subr.mxu0 0.0
        %884 = vmatpush1.msra.mxu0 %v856
        %885 = vmatprep.subr.mxu0 0.0
        %886 = vmatpush1.msra.mxu0 %v857
        %887 = vmatprep.subr.mxu0 0.0
        %888 = vmatpush1.msra.mxu0 %v858
        %889 = vmatprep.subr.mxu0 0.0
        %890 = vmatpush1.msra.mxu0 %v859
        %891 = vmatprep.subr.mxu0 0.0
        %892 = vmatpush1.msra.mxu0 %v860
        %893 = vmatprep.subr.mxu0 0.0
        %894 = vmatpush1.msra.mxu0 0.0
        %895 = vmatprep.subr.mxu0 0.0
        %896 = vmatpush1.msra.mxu0 0.0
        %897 = vmatprep.subr.mxu0 0.0
        %898 = vmatpush1.msra.mxu0 0.0
        %899 = vmatprep.subr.mxu0 0.0
        %900 = vmatpush1.msra.mxu0 0.0
        %901 = vmatprep.subr.mxu0 0.0
        %902 = vmatpush1.msra.mxu0 0.0
        %903 = vmatprep.subr.mxu0 0.0
        %904 = vmatpush1.msra.mxu0 0.0
        %905 = vmatprep.subr.mxu0 0.0
        %906 = vmatpush1.msra.mxu0 0.0
        %907 = vmatprep.subr.mxu0 0.0
        %908 = vmatpush1.msra.mxu0 0.0
        %909 = vmatprep.subr.mxu0 0.0
        %910 = vmatpush1.msra.mxu0 0.0
        %911 = vmatprep.subr.mxu0 0.0
        %912 = vmatpush1.msra.mxu0 0.0
        %913 = vmatprep.subr.mxu0 0.0
        %914 = vmatpush1.msra.mxu0 0.0
        %915 = vmatprep.subr.mxu0 0.0
        %916 = vmatpush1.msra.mxu0 0.0
        %917 = vmatprep.subr.mxu0 0.0
        %918 = vmatpush1.msra.mxu0 0.0
        %919 = vmatprep.subr.mxu0 0.0
        %920 = vmatpush1.msra.mxu0 0.0
        %921 = vmatprep.subr.mxu0 0.0
        %922 = vmatpush1.msra.mxu0 0.0
        %923 = vmatprep.subr.mxu0 0.0
        %924 = vmatpush1.msra.mxu0 0.0
        %925 = vmatprep.mubr.f32.mxu0 0.0
        %926 = vmatmul.mubr.f32.gmra.mrb[0].mxu0 %v612
        %v927 = vpop.f32.mrb[0].mxu0
        %v928 = vadd.f32 %v693, %v927
        %v929 = vpop.f32.mrb[0].mxu0
        %930 = vmatprep.mubr.f32.mxu0 0.0
        %931 = vmatmul.mubr.f32.gmra.mrb[0].mxu0 %v613
        %v932 = vpop.f32.mrb[0].mxu0
        %v933 = vadd.f32 %v699, %v932
        %v934 = vpop.f32.mrb[0].mxu0
        %935 = vmatprep.mubr.f32.mxu0 0.0
        %936 = vmatmul.mubr.f32.gmra.mrb[0].mxu0 %v614
        %v937 = vpop.f32.mrb[0].mxu0
        %v938 = vadd.f32 %v705, %v937
        %v939 = vpop.f32.mrb[0].mxu0
        %940 = vmatprep.mubr.f32.mxu0 0.0
        %941 = vmatmul.mubr.f32.gmra.mrb[0].mxu0 %v615
        %v942 = vpop.f32.mrb[0].mxu0
        %v943 = vadd.f32 %v711, %v942
        %v944 = vpop.f32.mrb[0].mxu0
        %945 = vmatprep.mubr.f32.mxu0 0.0
        %946 = vmatmul.mubr.f32.gmra.mrb[0].mxu0 %v616
        %v947 = vpop.f32.mrb[0].mxu0
        %v948 = vadd.f32 %v717, %v947
        %v949 = vpop.f32.mrb[0].mxu0
        %950 = vmatprep.mubr.f32.mxu0 0.0
        %951 = vmatmul.mubr.f32.gmra.mrb[0].mxu0 %v617
        %v952 = vpop.f32.mrb[0].mxu0
        %v953 = vadd.f32 %v723, %v952
        %v954 = vpop.f32.mrb[0].mxu0
        %955 = vmatprep.mubr.f32.mxu0 0.0
        %956 = vmatmul.mubr.f32.gmra.mrb[0].mxu0 %v618
        %v957 = vpop.f32.mrb[0].mxu0
        %v958 = vadd.f32 %v729, %v957
        %v959 = vpop.f32.mrb[0].mxu0
        %960 = vmatprep.mubr.f32.mxu0 0.0
        %961 = vmatmul.mubr.f32.gmra.mrb[0].mxu0 %v619
        %v962 = vpop.f32.mrb[0].mxu0
        %v963 = vadd.f32 %v735, %v962
        %v964 = vpop.f32.mrb[0].mxu0
        %965 = vdwg.mxu0
        %v966 = vlaneseq
        %v967 = vshrl.u32 %v966, 7
        %v968 = vsub.s32 0, %v967
        %v969 = vrot.slane %v844, %v968
        %v970 = vadd.f32 %v928, %v969
        %v971 = vadd.f32 %v933, %v969
        %v972 = vadd.f32 %v938, %v969
        %v973 = vadd.f32 %v943, %v969
        %v974 = vadd.f32 %v948, %v969
        %v975 = vadd.f32 %v953, %v969
        %v976 = vadd.f32 %v958, %v969
        %v977 = vadd.f32 %v963, %v969
        %978 = vadd.xlane.f32.xlu0 %v970
        %v979 = vpop.xlane.xlu0 %978
        %980 = vadd.xlane.f32.xlu0 %v971
        %v981 = vpop.xlane.xlu0 %980
        %982 = vadd.xlane.f32.xlu0 %v972
        %v983 = vpop.xlane.xlu0 %982
        %984 = vadd.xlane.f32.xlu0 %v973
        %v985 = vpop.xlane.xlu0 %984
        %986 = vadd.xlane.f32.xlu0 %v974
        %v987 = vpop.xlane.xlu0 %986
        %988 = vadd.xlane.f32.xlu0 %v975
        %v989 = vpop.xlane.xlu0 %988
        %990 = vadd.xlane.f32.xlu0 %v976
        %v991 = vpop.xlane.xlu0 %990
        %992 = vadd.xlane.f32.xlu0 %v977
        %v993 = vpop.xlane.xlu0 %992
        %v994 = vmul.f32 %v979, 0.03125
        %v995 = vmul.f32 %v981, 0.03125
        %v996 = vmul.f32 %v983, 0.03125
        %v997 = vmul.f32 %v985, 0.03125
        %v998 = vmul.f32 %v987, 0.03125
        %v999 = vmul.f32 %v989, 0.03125
        %v1000 = vmul.f32 %v991, 0.03125
        %v1001 = vmul.f32 %v993, 0.03125
        %v1002 = vsub.f32 %v970, %v994
        %v1003 = vsub.f32 %v971, %v995
        %v1004 = vsub.f32 %v972, %v996
        %v1005 = vsub.f32 %v973, %v997
        %v1006 = vsub.f32 %v974, %v998
        %v1007 = vsub.f32 %v975, %v999
        %v1008 = vsub.f32 %v976, %v1000
        %v1009 = vsub.f32 %v977, %v1001
        %v1010 = vmul.f32 %v1002, %v346
        %v1011 = vmul.f32 %v1003, %v346
        %v1012 = vmul.f32 %v1004, %v346
        %v1013 = vmul.f32 %v1005, %v346
        %v1014 = vmul.f32 %v1006, %v346
        %v1015 = vmul.f32 %v1007, %v346
        %v1016 = vmul.f32 %v1008, %v346
        %v1017 = vmul.f32 %v1009, %v346
        %v1018 = vmul.f32 %v1010, %v1010
        %v1019 = vmul.f32 %v1011, %v1011
        %v1020 = vmul.f32 %v1012, %v1012
        %v1021 = vmul.f32 %v1013, %v1013
        %v1022 = vmul.f32 %v1014, %v1014
        %v1023 = vmul.f32 %v1015, %v1015
        %v1024 = vmul.f32 %v1016, %v1016
        %v1025 = vmul.f32 %v1017, %v1017
        %1026 = vadd.xlane.f32.xlu0 %v1018
        %v1027 = vpop.xlane.xlu0 %1026
        %1028 = vadd.xlane.f32.xlu0 %v1019
        %v1029 = vpop.xlane.xlu0 %1028
        %1030 = vadd.xlane.f32.xlu0 %v1020
        %v1031 = vpop.xlane.xlu0 %1030
        %1032 = vadd.xlane.f32.xlu0 %v1021
        %v1033 = vpop.xlane.xlu0 %1032
        %1034 = vadd.xlane.f32.xlu0 %v1022
        %v1035 = vpop.xlane.xlu0 %1034
        %1036 = vadd.xlane.f32.xlu0 %v1023
        %v1037 = vpop.xlane.xlu0 %1036
        %1038 = vadd.xlane.f32.xlu0 %v1024
        %v1039 = vpop.xlane.xlu0 %1038
        %1040 = vadd.xlane.f32.xlu0 %v1025
        %v1041 = vpop.xlane.xlu0 %1040
        %v1042 = vmul.f32 %v1027, 0.03125
        %v1043 = vmul.f32 %v1029, 0.03125
        %v1044 = vmul.f32 %v1031, 0.03125
        %v1045 = vmul.f32 %v1033, 0.03125
        %v1046 = vmul.f32 %v1035, 0.03125
        %v1047 = vmul.f32 %v1037, 0.03125
        %v1048 = vmul.f32 %v1039, 0.03125
        %v1049 = vmul.f32 %v1041, 0.03125
        %v1050 = vadd.f32 %v1042, 1e-05
        %v1051 = vadd.f32 %v1043, 1e-05
        %v1052 = vadd.f32 %v1044, 1e-05
        %v1053 = vadd.f32 %v1045, 1e-05
        %v1054 = vadd.f32 %v1046, 1e-05
        %v1055 = vadd.f32 %v1047, 1e-05
        %v1056 = vadd.f32 %v1048, 1e-05
        %v1057 = vadd.f32 %v1049, 1e-05
        %v1058 = vrsqrt.pop %v1050
        %v1059 = vrsqrt.pop %v1051
        %v1060 = vrsqrt.pop %v1052
        %v1061 = vrsqrt.pop %v1053
        %v1062 = vrsqrt.pop %v1054
        %v1063 = vrsqrt.pop %v1055
        %v1064 = vrsqrt.pop %v1056
        %v1065 = vrsqrt.pop %v1057
        %v1066 = vmul.f32 %v1010, %v1058
        %v1067 = vmul.f32 %v1011, %v1059
        %v1068 = vmul.f32 %v1012, %v1060
        %v1069 = vmul.f32 %v1013, %v1061
        %v1070 = vmul.f32 %v1014, %v1062
        %v1071 = vmul.f32 %v1015, %v1063
        %v1072 = vmul.f32 %v1016, %v1064
        %v1073 = vmul.f32 %v1017, %v1065
        %v1074 = vlaneseq
        %v1075 = vshrl.u32 %v1074, 7
        %v1076 = vsub.s32 1, %v1075
        %v1077 = vrot.slane %v844, %v1076
        %v1078 = vmul.f32 %v1066, %v1077
        %v1079 = vmul.f32 %v1067, %v1077
        %v1080 = vmul.f32 %v1068, %v1077
        %v1081 = vmul.f32 %v1069, %v1077
        %v1082 = vmul.f32 %v1070, %v1077
        %v1083 = vmul.f32 %v1071, %v1077
        %v1084 = vmul.f32 %v1072, %v1077
        %v1085 = vmul.f32 %v1073, %v1077
        %v1086 = vlaneseq
        %v1087 = vshrl.u32 %v1086, 7
        %v1088 = vsub.s32 2, %v1087
        %v1089 = vrot.slane %v844, %v1088
        %v1090 = vadd.f32 %v1078, %v1089
        %v1091 = vadd.f32 %v1079, %v1089
        %v1092 = vadd.f32 %v1080, %v1089
        %v1093 = vadd.f32 %v1081, %v1089
        %v1094 = vadd.f32 %v1082, %v1089
        %v1095 = vadd.f32 %v1083, %v1089
        %v1096 = vadd.f32 %v1084, %v1089
        %v1097 = vadd.f32 %v1085, %v1089
        %v1098 = vmax.f32 %v1090, 0.0
        %v1099 = vmax.f32 %v1091, 0.0
        %v1100 = vmax.f32 %v1092, 0.0
        %v1101 = vmax.f32 %v1093, 0.0
        %v1102 = vmax.f32 %v1094, 0.0
        %v1103 = vmax.f32 %v1095, 0.0
        %v1104 = vmax.f32 %v1096, 0.0
        %v1105 = vmax.f32 %v1097, 0.0
        %1106 = vst [vmem:[%s318] sm:$0xff] %v1098
        %1107 = vst [vmem:[%s318 + $0x8] sm:$0xff] %v1099
        %1108 = vst [vmem:[%s318 + $0x10] sm:$0xff] %v1100
        %1109 = vst [vmem:[%s318 + $0x18] sm:$0xff] %v1101
        %1110 = vst [vmem:[%s318 + $0x20] sm:$0xff] %v1102
        %1111 = vst [vmem:[%s318 + $0x28] sm:$0xff] %v1103
        %1112 = vst [vmem:[%s318 + $0x30] sm:$0xff] %v1104
        %1113 = vst [vmem:[%s318 + $0x38] sm:$0xff] %v1105
        %s1114 = scalar_lea.vmem %s5, 4
        %v1115 = vld [vmem:[%s1114] sm:$0x7]
        %s1116 = scalar_lea.vmem [#allocation2], 128
        %v1117 = vld [vmem:[%s1116] sm:$0xff]
        %v1118 = vld [vmem:[%s1116 + $0x8] sm:$0xff]
        %v1119 = vld [vmem:[%s1116 + $0x10] sm:$0xff]
        %v1120 = vld [vmem:[%s1116 + $0x18] sm:$0xff]
        %v1121 = vld [vmem:[%s1116 + $0x20] sm:$0xff]
        %v1122 = vld [vmem:[%s1116 + $0x28] sm:$0xff]
        %v1123 = vld [vmem:[%s1116 + $0x30] sm:$0xff]
        %v1124 = vld [vmem:[%s1116 + $0x38] sm:$0xff]
        %v1125 = vld [vmem:[%s1116 + $0x40] sm:$0xff]
        %v1126 = vld [vmem:[%s1116 + $0x48] sm:$0xff]
        %v1127 = vld [vmem:[%s1116 + $0x50] sm:$0xff]
        %v1128 = vld [vmem:[%s1116 + $0x58] sm:$0xff]
        %v1129 = vld [vmem:[%s1116 + $0x60] sm:$0xff]
        %v1130 = vld [vmem:[%s1116 + $0x68] sm:$0xff]
        %v1131 = vld [vmem:[%s1116 + $0x70] sm:$0xff]
        %v1132 = vld [vmem:[%s1116 + $0x78] sm:$0xff]
        %1133 = vmatprep.subr.mxu0 0.0
        %1134 = vmatpush1.msra.mxu0 %v1117
        %1135 = vmatprep.subr.mxu0 0.0
        %1136 = vmatpush1.msra.mxu0 %v1118
        %1137 = vmatprep.subr.mxu0 0.0
        %1138 = vmatpush1.msra.mxu0 %v1119
        %1139 = vmatprep.subr.mxu0 0.0
        %1140 = vmatpush1.msra.mxu0 %v1120
        %1141 = vmatprep.subr.mxu0 0.0
        %1142 = vmatpush1.msra.mxu0 %v1121
        %1143 = vmatprep.subr.mxu0 0.0
        %1144 = vmatpush1.msra.mxu0 %v1122
        %1145 = vmatprep.subr.mxu0 0.0
        %1146 = vmatpush1.msra.mxu0 %v1123
        %1147 = vmatprep.subr.mxu0 0.0
        %1148 = vmatpush1.msra.mxu0 %v1124
        %1149 = vmatprep.subr.mxu0 0.0
        %1150 = vmatpush1.msra.mxu0 %v1125
        %1151 = vmatprep.subr.mxu0 0.0
        %1152 = vmatpush1.msra.mxu0 %v1126
        %1153 = vmatprep.subr.mxu0 0.0
        %1154 = vmatpush1.msra.mxu0 %v1127
        %1155 = vmatprep.subr.mxu0 0.0
        %1156 = vmatpush1.msra.mxu0 %v1128
        %1157 = vmatprep.subr.mxu0 0.0
        %1158 = vmatpush1.msra.mxu0 %v1129
        %1159 = vmatprep.subr.mxu0 0.0
        %1160 = vmatpush1.msra.mxu0 %v1130
        %1161 = vmatprep.subr.mxu0 0.0
        %1162 = vmatpush1.msra.mxu0 %v1131
        %1163 = vmatprep.subr.mxu0 0.0
        %1164 = vmatpush1.msra.mxu0 %v1132
        %1165 = vmatprep.subr.mxu0 0.0
        %1166 = vmatpush1.msra.mxu0 0.0
        %1167 = vmatprep.subr.mxu0 0.0
        %1168 = vmatpush1.msra.mxu0 0.0
        %1169 = vmatprep.subr.mxu0 0.0
        %1170 = vmatpush1.msra.mxu0 0.0
        %1171 = vmatprep.subr.mxu0 0.0
        %1172 = vmatpush1.msra.mxu0 0.0
        %1173 = vmatprep.subr.mxu0 0.0
        %1174 = vmatpush1.msra.mxu0 0.0
        %1175 = vmatprep.subr.mxu0 0.0
        %1176 = vmatpush1.msra.mxu0 0.0
        %1177 = vmatprep.subr.mxu0 0.0
        %1178 = vmatpush1.msra.mxu0 0.0
        %1179 = vmatprep.subr.mxu0 0.0
        %1180 = vmatpush1.msra.mxu0 0.0
        %1181 = vmatprep.subr.mxu0 0.0
        %1182 = vmatpush1.msra.mxu0 0.0
        %1183 = vmatprep.subr.mxu0 0.0
        %1184 = vmatpush1.msra.mxu0 0.0
        %1185 = vmatprep.subr.mxu0 0.0
        %1186 = vmatpush1.msra.mxu0 0.0
        %1187 = vmatprep.subr.mxu0 0.0
        %1188 = vmatpush1.msra.mxu0 0.0
        %1189 = vmatprep.subr.mxu0 0.0
        %1190 = vmatpush1.msra.mxu0 0.0
        %1191 = vmatprep.subr.mxu0 0.0
        %1192 = vmatpush1.msra.mxu0 0.0
        %1193 = vmatprep.subr.mxu0 0.0
        %1194 = vmatpush1.msra.mxu0 0.0
        %1195 = vmatprep.subr.mxu0 0.0
        %1196 = vmatpush1.msra.mxu0 0.0
        %1197 = vmatprep.mubr.f32.mxu0 0.0
        %1198 = vmatmul.mubr.f32.gmra.mrb[0].mxu0 %v1098
        %v1199 = vpop.f32.mrb[0].mxu0
        %v1200 = vadd.f32 %v695, %v1199
        %v1201 = vpop.f32.mrb[0].mxu0
        %1202 = vmatprep.mubr.f32.mxu0 0.0
        %1203 = vmatmul.mubr.f32.gmra.mrb[0].mxu0 %v1099
        %v1204 = vpop.f32.mrb[0].mxu0
        %v1205 = vadd.f32 %v701, %v1204
        %v1206 = vpop.f32.mrb[0].mxu0
        %1207 = vmatprep.mubr.f32.mxu0 0.0
        %1208 = vmatmul.mubr.f32.gmra.mrb[0].mxu0 %v1100
        %v1209 = vpop.f32.mrb[0].mxu0
        %v1210 = vadd.f32 %v707, %v1209
        %v1211 = vpop.f32.mrb[0].mxu0
        %1212 = vmatprep.mubr.f32.mxu0 0.0
        %1213 = vmatmul.mubr.f32.gmra.mrb[0].mxu0 %v1101
        %v1214 = vpop.f32.mrb[0].mxu0
        %v1215 = vadd.f32 %v713, %v1214
        %v1216 = vpop.f32.mrb[0].mxu0
        %1217 = vmatprep.mubr.f32.mxu0 0.0
        %1218 = vmatmul.mubr.f32.gmra.mrb[0].mxu0 %v1102
        %v1219 = vpop.f32.mrb[0].mxu0
        %v1220 = vadd.f32 %v719, %v1219
        %v1221 = vpop.f32.mrb[0].mxu0
        %1222 = vmatprep.mubr.f32.mxu0 0.0
        %1223 = vmatmul.mubr.f32.gmra.mrb[0].mxu0 %v1103
        %v1224 = vpop.f32.mrb[0].mxu0
        %v1225 = vadd.f32 %v725, %v1224
        %v1226 = vpop.f32.mrb[0].mxu0
        %1227 = vmatprep.mubr.f32.mxu0 0.0
        %1228 = vmatmul.mubr.f32.gmra.mrb[0].mxu0 %v1104
        %v1229 = vpop.f32.mrb[0].mxu0
        %v1230 = vadd.f32 %v731, %v1229
        %v1231 = vpop.f32.mrb[0].mxu0
        %1232 = vmatprep.mubr.f32.mxu0 0.0
        %1233 = vmatmul.mubr.f32.gmra.mrb[0].mxu0 %v1105
        %v1234 = vpop.f32.mrb[0].mxu0
        %v1235 = vadd.f32 %v737, %v1234
        %v1236 = vpop.f32.mrb[0].mxu0
        %1237 = vdwg.mxu0
        %v1238 = vlaneseq
        %v1239 = vshrl.u32 %v1238, 7
        %v1240 = vsub.s32 0, %v1239
        %v1241 = vrot.slane %v1115, %v1240
        %v1242 = vadd.f32 %v1200, %v1241
        %v1243 = vadd.f32 %v1205, %v1241
        %v1244 = vadd.f32 %v1210, %v1241
        %v1245 = vadd.f32 %v1215, %v1241
        %v1246 = vadd.f32 %v1220, %v1241
        %v1247 = vadd.f32 %v1225, %v1241
        %v1248 = vadd.f32 %v1230, %v1241
        %v1249 = vadd.f32 %v1235, %v1241
        %1250 = vadd.xlane.f32.xlu0 %v1242
        %v1251 = vpop.xlane.xlu0 %1250
        %1252 = vadd.xlane.f32.xlu0 %v1243
        %v1253 = vpop.xlane.xlu0 %1252
        %1254 = vadd.xlane.f32.xlu0 %v1244
        %v1255 = vpop.xlane.xlu0 %1254
        %1256 = vadd.xlane.f32.xlu0 %v1245
        %v1257 = vpop.xlane.xlu0 %1256
        %1258 = vadd.xlane.f32.xlu0 %v1246
        %v1259 = vpop.xlane.xlu0 %1258
        %1260 = vadd.xlane.f32.xlu0 %v1247
        %v1261 = vpop.xlane.xlu0 %1260
        %1262 = vadd.xlane.f32.xlu0 %v1248
        %v1263 = vpop.xlane.xlu0 %1262
        %1264 = vadd.xlane.f32.xlu0 %v1249
        %v1265 = vpop.xlane.xlu0 %1264
        %v1266 = vmul.f32 %v1251, 0.03125
        %v1267 = vmul.f32 %v1253, 0.03125
        %v1268 = vmul.f32 %v1255, 0.03125
        %v1269 = vmul.f32 %v1257, 0.03125
        %v1270 = vmul.f32 %v1259, 0.03125
        %v1271 = vmul.f32 %v1261, 0.03125
        %v1272 = vmul.f32 %v1263, 0.03125
        %v1273 = vmul.f32 %v1265, 0.03125
        %v1274 = vsub.f32 %v1242, %v1266
        %v1275 = vsub.f32 %v1243, %v1267
        %v1276 = vsub.f32 %v1244, %v1268
        %v1277 = vsub.f32 %v1245, %v1269
        %v1278 = vsub.f32 %v1246, %v1270
        %v1279 = vsub.f32 %v1247, %v1271
        %v1280 = vsub.f32 %v1248, %v1272
        %v1281 = vsub.f32 %v1249, %v1273
        %v1282 = vmul.f32 %v1274, %v346
        %v1283 = vmul.f32 %v1275, %v346
        %v1284 = vmul.f32 %v1276, %v346
        %v1285 = vmul.f32 %v1277, %v346
        %v1286 = vmul.f32 %v1278, %v346
        %v1287 = vmul.f32 %v1279, %v346
        %v1288 = vmul.f32 %v1280, %v346
        %v1289 = vmul.f32 %v1281, %v346
        %v1290 = vmul.f32 %v1282, %v1282
        %v1291 = vmul.f32 %v1283, %v1283
        %v1292 = vmul.f32 %v1284, %v1284
        %v1293 = vmul.f32 %v1285, %v1285
        %v1294 = vmul.f32 %v1286, %v1286
        %v1295 = vmul.f32 %v1287, %v1287
        %v1296 = vmul.f32 %v1288, %v1288
        %v1297 = vmul.f32 %v1289, %v1289
        %1298 = vadd.xlane.f32.xlu0 %v1290
        %v1299 = vpop.xlane.xlu0 %1298
        %1300 = vadd.xlane.f32.xlu0 %v1291
        %v1301 = vpop.xlane.xlu0 %1300
        %1302 = vadd.xlane.f32.xlu0 %v1292
        %v1303 = vpop.xlane.xlu0 %1302
        %1304 = vadd.xlane.f32.xlu0 %v1293
        %v1305 = vpop.xlane.xlu0 %1304
        %1306 = vadd.xlane.f32.xlu0 %v1294
        %v1307 = vpop.xlane.xlu0 %1306
        %1308 = vadd.xlane.f32.xlu0 %v1295
        %v1309 = vpop.xlane.xlu0 %1308
        %1310 = vadd.xlane.f32.xlu0 %v1296
        %v1311 = vpop.xlane.xlu0 %1310
        %1312 = vadd.xlane.f32.xlu0 %v1297
        %v1313 = vpop.xlane.xlu0 %1312
        %v1314 = vmul.f32 %v1299, 0.03125
        %v1315 = vmul.f32 %v1301, 0.03125
        %v1316 = vmul.f32 %v1303, 0.03125
        %v1317 = vmul.f32 %v1305, 0.03125
        %v1318 = vmul.f32 %v1307, 0.03125
        %v1319 = vmul.f32 %v1309, 0.03125
        %v1320 = vmul.f32 %v1311, 0.03125
        %v1321 = vmul.f32 %v1313, 0.03125
        %v1322 = vadd.f32 %v1314, 1e-05
        %v1323 = vadd.f32 %v1315, 1e-05
        %v1324 = vadd.f32 %v1316, 1e-05
        %v1325 = vadd.f32 %v1317, 1e-05
        %v1326 = vadd.f32 %v1318, 1e-05
        %v1327 = vadd.f32 %v1319, 1e-05
        %v1328 = vadd.f32 %v1320, 1e-05
        %v1329 = vadd.f32 %v1321, 1e-05
        %v1330 = vrsqrt.pop %v1322
        %v1331 = vrsqrt.pop %v1323
        %v1332 = vrsqrt.pop %v1324
        %v1333 = vrsqrt.pop %v1325
        %v1334 = vrsqrt.pop %v1326
        %v1335 = vrsqrt.pop %v1327
        %v1336 = vrsqrt.pop %v1328
        %v1337 = vrsqrt.pop %v1329
        %v1338 = vmul.f32 %v1282, %v1330
        %v1339 = vmul.f32 %v1283, %v1331
        %v1340 = vmul.f32 %v1284, %v1332
        %v1341 = vmul.f32 %v1285, %v1333
        %v1342 = vmul.f32 %v1286, %v1334
        %v1343 = vmul.f32 %v1287, %v1335
        %v1344 = vmul.f32 %v1288, %v1336
        %v1345 = vmul.f32 %v1289, %v1337
        %v1346 = vlaneseq
        %v1347 = vshrl.u32 %v1346, 7
        %v1348 = vsub.s32 1, %v1347
        %v1349 = vrot.slane %v1115, %v1348
        %v1350 = vmul.f32 %v1338, %v1349
        %v1351 = vmul.f32 %v1339, %v1349
        %v1352 = vmul.f32 %v1340, %v1349
        %v1353 = vmul.f32 %v1341, %v1349
        %v1354 = vmul.f32 %v1342, %v1349
        %v1355 = vmul.f32 %v1343, %v1349
        %v1356 = vmul.f32 %v1344, %v1349
        %v1357 = vmul.f32 %v1345, %v1349
        %v1358 = vlaneseq
        %v1359 = vshrl.u32 %v1358, 7
        %v1360 = vsub.s32 2, %v1359
        %v1361 = vrot.slane %v1115, %v1360
        %v1362 = vadd.f32 %v1350, %v1361
        %v1363 = vadd.f32 %v1351, %v1361
        %v1364 = vadd.f32 %v1352, %v1361
        %v1365 = vadd.f32 %v1353, %v1361
        %v1366 = vadd.f32 %v1354, %v1361
        %v1367 = vadd.f32 %v1355, %v1361
        %v1368 = vadd.f32 %v1356, %v1361
        %v1369 = vadd.f32 %v1357, %v1361
        %v1370 = vmax.f32 %v1362, 0.0
        %v1371 = vmax.f32 %v1363, 0.0
        %v1372 = vmax.f32 %v1364, 0.0
        %v1373 = vmax.f32 %v1365, 0.0
        %v1374 = vmax.f32 %v1366, 0.0
        %v1375 = vmax.f32 %v1367, 0.0
        %v1376 = vmax.f32 %v1368, 0.0
        %v1377 = vmax.f32 %v1369, 0.0
        %1378 = vst [vmem:[%s325] sm:$0xff] %v1370
        %1379 = vst [vmem:[%s325 + $0x8] sm:$0xff] %v1371
        %1380 = vst [vmem:[%s325 + $0x10] sm:$0xff] %v1372
        %1381 = vst [vmem:[%s325 + $0x18] sm:$0xff] %v1373
        %1382 = vst [vmem:[%s325 + $0x20] sm:$0xff] %v1374
        %1383 = vst [vmem:[%s325 + $0x28] sm:$0xff] %v1375
        %1384 = vst [vmem:[%s325 + $0x30] sm:$0xff] %v1376
        %1385 = vst [vmem:[%s325 + $0x38] sm:$0xff] %v1377
        %s1386 = scalar_lea.vmem %s5, 8
        %v1387 = vld [vmem:[%s1386] sm:$0x7]
        %s1388 = scalar_lea.vmem [#allocation2], 256
        %v1389 = vld [vmem:[%s1388] sm:$0xff]
        %v1390 = vld [vmem:[%s1388 + $0x8] sm:$0xff]
        %v1391 = vld [vmem:[%s1388 + $0x10] sm:$0xff]
        %v1392 = vld [vmem:[%s1388 + $0x18] sm:$0xff]
        %v1393 = vld [vmem:[%s1388 + $0x20] sm:$0xff]
        %v1394 = vld [vmem:[%s1388 + $0x28] sm:$0xff]
        %v1395 = vld [vmem:[%s1388 + $0x30] sm:$0xff]
        %v1396 = vld [vmem:[%s1388 + $0x38] sm:$0xff]
        %v1397 = vld [vmem:[%s1388 + $0x40] sm:$0xff]
        %v1398 = vld [vmem:[%s1388 + $0x48] sm:$0xff]
        %v1399 = vld [vmem:[%s1388 + $0x50] sm:$0xff]
        %v1400 = vld [vmem:[%s1388 + $0x58] sm:$0xff]
        %v1401 = vld [vmem:[%s1388 + $0x60] sm:$0xff]
        %v1402 = vld [vmem:[%s1388 + $0x68] sm:$0xff]
        %v1403 = vld [vmem:[%s1388 + $0x70] sm:$0xff]
        %v1404 = vld [vmem:[%s1388 + $0x78] sm:$0xff]
        %1405 = vmatprep.subr.mxu0 0.0
        %1406 = vmatpush1.msra.mxu0 %v1389
        %1407 = vmatprep.subr.mxu0 0.0
        %1408 = vmatpush1.msra.mxu0 %v1390
        %1409 = vmatprep.subr.mxu0 0.0
        %1410 = vmatpush1.msra.mxu0 %v1391
        %1411 = vmatprep.subr.mxu0 0.0
        %1412 = vmatpush1.msra.mxu0 %v1392
        %1413 = vmatprep.subr.mxu0 0.0
        %1414 = vmatpush1.msra.mxu0 %v1393
        %1415 = vmatprep.subr.mxu0 0.0
        %1416 = vmatpush1.msra.mxu0 %v1394
        %1417 = vmatprep.subr.mxu0 0.0
        %1418 = vmatpush1.msra.mxu0 %v1395
        %1419 = vmatprep.subr.mxu0 0.0
        %1420 = vmatpush1.msra.mxu0 %v1396
        %1421 = vmatprep.subr.mxu0 0.0
        %1422 = vmatpush1.msra.mxu0 %v1397
        %1423 = vmatprep.subr.mxu0 0.0
        %1424 = vmatpush1.msra.mxu0 %v1398
        %1425 = vmatprep.subr.mxu0 0.0
        %1426 = vmatpush1.msra.mxu0 %v1399
        %1427 = vmatprep.subr.mxu0 0.0
        %1428 = vmatpush1.msra.mxu0 %v1400
        %1429 = vmatprep.subr.mxu0 0.0
        %1430 = vmatpush1.msra.mxu0 %v1401
        %1431 = vmatprep.subr.mxu0 0.0
        %1432 = vmatpush1.msra.mxu0 %v1402
        %1433 = vmatprep.subr.mxu0 0.0
        %1434 = vmatpush1.msra.mxu0 %v1403
        %1435 = vmatprep.subr.mxu0 0.0
        %1436 = vmatpush1.msra.mxu0 %v1404
        %1437 = vmatprep.subr.mxu0 0.0
        %1438 = vmatpush1.msra.mxu0 0.0
        %1439 = vmatprep.subr.mxu0 0.0
        %1440 = vmatpush1.msra.mxu0 0.0
        %1441 = vmatprep.subr.mxu0 0.0
        %1442 = vmatpush1.msra.mxu0 0.0
        %1443 = vmatprep.subr.mxu0 0.0
        %1444 = vmatpush1.msra.mxu0 0.0
        %1445 = vmatprep.subr.mxu0 0.0
        %1446 = vmatpush1.msra.mxu0 0.0
        %1447 = vmatprep.subr.mxu0 0.0
        %1448 = vmatpush1.msra.mxu0 0.0
        %1449 = vmatprep.subr.mxu0 0.0
        %1450 = vmatpush1.msra.mxu0 0.0
        %1451 = vmatprep.subr.mxu0 0.0
        %1452 = vmatpush1.msra.mxu0 0.0
        %1453 = vmatprep.subr.mxu0 0.0
        %1454 = vmatpush1.msra.mxu0 0.0
        %1455 = vmatprep.subr.mxu0 0.0
        %1456 = vmatpush1.msra.mxu0 0.0
        %1457 = vmatprep.subr.mxu0 0.0
        %1458 = vmatpush1.msra.mxu0 0.0
        %1459 = vmatprep.subr.mxu0 0.0
        %1460 = vmatpush1.msra.mxu0 0.0
        %1461 = vmatprep.subr.mxu0 0.0
        %1462 = vmatpush1.msra.mxu0 0.0
        %1463 = vmatprep.subr.mxu0 0.0
        %1464 = vmatpush1.msra.mxu0 0.0
        %1465 = vmatprep.subr.mxu0 0.0
        %1466 = vmatpush1.msra.mxu0 0.0
        %1467 = vmatprep.subr.mxu0 0.0
        %1468 = vmatpush1.msra.mxu0 0.0
        %1469 = vmatprep.mubr.f32.mxu0 0.0
        %1470 = vmatmul.mubr.f32.gmra.mrb[0].mxu0 %v1370
        %v1471 = vpop.f32.mrb[0].mxu0
        %v1472 = vadd.f32 %v806, %v1471
        %v1473 = vpop.f32.mrb[0].mxu0
        %1474 = vmatprep.mubr.f32.mxu0 0.0
        %1475 = vmatmul.mubr.f32.gmra.mrb[0].mxu0 %v1371
        %v1476 = vpop.f32.mrb[0].mxu0
        %v1477 = vadd.f32 %v811, %v1476
        %v1478 = vpop.f32.mrb[0].mxu0
        %1479 = vmatprep.mubr.f32.mxu0 0.0
        %1480 = vmatmul.mubr.f32.gmra.mrb[0].mxu0 %v1372
        %v1481 = vpop.f32.mrb[0].mxu0
        %v1482 = vadd.f32 %v816, %v1481
        %v1483 = vpop.f32.mrb[0].mxu0
        %1484 = vmatprep.mubr.f32.mxu0 0.0
        %1485 = vmatmul.mubr.f32.gmra.mrb[0].mxu0 %v1373
        %v1486 = vpop.f32.mrb[0].mxu0
        %v1487 = vadd.f32 %v821, %v1486
        %v1488 = vpop.f32.mrb[0].mxu0
        %1489 = vmatprep.mubr.f32.mxu0 0.0
        %1490 = vmatmul.mubr.f32.gmra.mrb[0].mxu0 %v1374
        %v1491 = vpop.f32.mrb[0].mxu0
        %v1492 = vadd.f32 %v826, %v1491
        %v1493 = vpop.f32.mrb[0].mxu0
        %1494 = vmatprep.mubr.f32.mxu0 0.0
        %1495 = vmatmul.mubr.f32.gmra.mrb[0].mxu0 %v1375
        %v1496 = vpop.f32.mrb[0].mxu0
        %v1497 = vadd.f32 %v831, %v1496
        %v1498 = vpop.f32.mrb[0].mxu0
        %1499 = vmatprep.mubr.f32.mxu0 0.0
        %1500 = vmatmul.mubr.f32.gmra.mrb[0].mxu0 %v1376
        %v1501 = vpop.f32.mrb[0].mxu0
        %v1502 = vadd.f32 %v836, %v1501
        %v1503 = vpop.f32.mrb[0].mxu0
        %1504 = vmatprep.mubr.f32.mxu0 0.0
        %1505 = vmatmul.mubr.f32.gmra.mrb[0].mxu0 %v1377
        %v1506 = vpop.f32.mrb[0].mxu0
        %v1507 = vadd.f32 %v841, %v1506
        %v1508 = vpop.f32.mrb[0].mxu0
        %1509 = vdwg.mxu0
        %v1510 = vlaneseq
        %v1511 = vshrl.u32 %v1510, 7
        %v1512 = vsub.s32 0, %v1511
        %v1513 = vrot.slane %v1387, %v1512
        %v1514 = vadd.f32 %v1472, %v1513
        %v1515 = vadd.f32 %v1477, %v1513
        %v1516 = vadd.f32 %v1482, %v1513
        %v1517 = vadd.f32 %v1487, %v1513
        %v1518 = vadd.f32 %v1492, %v1513
        %v1519 = vadd.f32 %v1497, %v1513
        %v1520 = vadd.f32 %v1502, %v1513
        %v1521 = vadd.f32 %v1507, %v1513
        %1522 = vadd.xlane.f32.xlu0 %v1514
        %v1523 = vpop.xlane.xlu0 %1522
        %1524 = vadd.xlane.f32.xlu0 %v1515
        %v1525 = vpop.xlane.xlu0 %1524
        %1526 = vadd.xlane.f32.xlu0 %v1516
        %v1527 = vpop.xlane.xlu0 %1526
        %1528 = vadd.xlane.f32.xlu0 %v1517
        %v1529 = vpop.xlane.xlu0 %1528
        %1530 = vadd.xlane.f32.xlu0 %v1518
        %v1531 = vpop.xlane.xlu0 %1530
        %1532 = vadd.xlane.f32.xlu0 %v1519
        %v1533 = vpop.xlane.xlu0 %1532
        %1534 = vadd.xlane.f32.xlu0 %v1520
        %v1535 = vpop.xlane.xlu0 %1534
        %1536 = vadd.xlane.f32.xlu0 %v1521
        %v1537 = vpop.xlane.xlu0 %1536
        %v1538 = vmul.f32 %v1523, 0.03125
        %v1539 = vmul.f32 %v1525, 0.03125
        %v1540 = vmul.f32 %v1527, 0.03125
        %v1541 = vmul.f32 %v1529, 0.03125
        %v1542 = vmul.f32 %v1531, 0.03125
        %v1543 = vmul.f32 %v1533, 0.03125
        %v1544 = vmul.f32 %v1535, 0.03125
        %v1545 = vmul.f32 %v1537, 0.03125
        %v1546 = vsub.f32 %v1514, %v1538
        %v1547 = vsub.f32 %v1515, %v1539
        %v1548 = vsub.f32 %v1516, %v1540
        %v1549 = vsub.f32 %v1517, %v1541
        %v1550 = vsub.f32 %v1518, %v1542
        %v1551 = vsub.f32 %v1519, %v1543
        %v1552 = vsub.f32 %v1520, %v1544
        %v1553 = vsub.f32 %v1521, %v1545
        %v1554 = vmul.f32 %v1546, %v346
        %v1555 = vmul.f32 %v1547, %v346
        %v1556 = vmul.f32 %v1548, %v346
        %v1557 = vmul.f32 %v1549, %v346
        %v1558 = vmul.f32 %v1550, %v346
        %v1559 = vmul.f32 %v1551, %v346
        %v1560 = vmul.f32 %v1552, %v346
        %v1561 = vmul.f32 %v1553, %v346
        %v1562 = vmul.f32 %v1554, %v1554
        %v1563 = vmul.f32 %v1555, %v1555
        %v1564 = vmul.f32 %v1556, %v1556
        %v1565 = vmul.f32 %v1557, %v1557
        %v1566 = vmul.f32 %v1558, %v1558
        %v1567 = vmul.f32 %v1559, %v1559
        %v1568 = vmul.f32 %v1560, %v1560
        %v1569 = vmul.f32 %v1561, %v1561
        %1570 = vadd.xlane.f32.xlu0 %v1562
        %v1571 = vpop.xlane.xlu0 %1570
        %1572 = vadd.xlane.f32.xlu0 %v1563
        %v1573 = vpop.xlane.xlu0 %1572
        %1574 = vadd.xlane.f32.xlu0 %v1564
        %v1575 = vpop.xlane.xlu0 %1574
        %1576 = vadd.xlane.f32.xlu0 %v1565
        %v1577 = vpop.xlane.xlu0 %1576
        %1578 = vadd.xlane.f32.xlu0 %v1566
        %v1579 = vpop.xlane.xlu0 %1578
        %1580 = vadd.xlane.f32.xlu0 %v1567
        %v1581 = vpop.xlane.xlu0 %1580
        %1582 = vadd.xlane.f32.xlu0 %v1568
        %v1583 = vpop.xlane.xlu0 %1582
        %1584 = vadd.xlane.f32.xlu0 %v1569
        %v1585 = vpop.xlane.xlu0 %1584
        %v1586 = vmul.f32 %v1571, 0.03125
        %v1587 = vmul.f32 %v1573, 0.03125
        %v1588 = vmul.f32 %v1575, 0.03125
        %v1589 = vmul.f32 %v1577, 0.03125
        %v1590 = vmul.f32 %v1579, 0.03125
        %v1591 = vmul.f32 %v1581, 0.03125
        %v1592 = vmul.f32 %v1583, 0.03125
        %v1593 = vmul.f32 %v1585, 0.03125
        %v1594 = vadd.f32 %v1586, 1e-05
        %v1595 = vadd.f32 %v1587, 1e-05
        %v1596 = vadd.f32 %v1588, 1e-05
        %v1597 = vadd.f32 %v1589, 1e-05
        %v1598 = vadd.f32 %v1590, 1e-05
        %v1599 = vadd.f32 %v1591, 1e-05
        %v1600 = vadd.f32 %v1592, 1e-05
        %v1601 = vadd.f32 %v1593, 1e-05
        %v1602 = vrsqrt.pop %v1594
        %v1603 = vrsqrt.pop %v1595
        %v1604 = vrsqrt.pop %v1596
        %v1605 = vrsqrt.pop %v1597
        %v1606 = vrsqrt.pop %v1598
        %v1607 = vrsqrt.pop %v1599
        %v1608 = vrsqrt.pop %v1600
        %v1609 = vrsqrt.pop %v1601
        %v1610 = vmul.f32 %v1554, %v1602
        %v1611 = vmul.f32 %v1555, %v1603
        %v1612 = vmul.f32 %v1556, %v1604
        %v1613 = vmul.f32 %v1557, %v1605
        %v1614 = vmul.f32 %v1558, %v1606
        %v1615 = vmul.f32 %v1559, %v1607
        %v1616 = vmul.f32 %v1560, %v1608
        %v1617 = vmul.f32 %v1561, %v1609
        %v1618 = vlaneseq
        %v1619 = vshrl.u32 %v1618, 7
        %v1620 = vsub.s32 1, %v1619
        %v1621 = vrot.slane %v1387, %v1620
        %v1622 = vmul.f32 %v1610, %v1621
        %v1623 = vmul.f32 %v1611, %v1621
        %v1624 = vmul.f32 %v1612, %v1621
        %v1625 = vmul.f32 %v1613, %v1621
        %v1626 = vmul.f32 %v1614, %v1621
        %v1627 = vmul.f32 %v1615, %v1621
        %v1628 = vmul.f32 %v1616, %v1621
        %v1629 = vmul.f32 %v1617, %v1621
        %v1630 = vlaneseq
        %v1631 = vshrl.u32 %v1630, 7
        %v1632 = vsub.s32 2, %v1631
        %v1633 = vrot.slane %v1387, %v1632
        %v1634 = vadd.f32 %v1622, %v1633
        %v1635 = vadd.f32 %v1623, %v1633
        %v1636 = vadd.f32 %v1624, %v1633
        %v1637 = vadd.f32 %v1625, %v1633
        %v1638 = vadd.f32 %v1626, %v1633
        %v1639 = vadd.f32 %v1627, %v1633
        %v1640 = vadd.f32 %v1628, %v1633
        %v1641 = vadd.f32 %v1629, %v1633
        %v1642 = vmax.f32 %v1634, 0.0
        %v1643 = vmax.f32 %v1635, 0.0
        %v1644 = vmax.f32 %v1636, 0.0
        %v1645 = vmax.f32 %v1637, 0.0
        %v1646 = vmax.f32 %v1638, 0.0
        %v1647 = vmax.f32 %v1639, 0.0
        %v1648 = vmax.f32 %v1640, 0.0
        %v1649 = vmax.f32 %v1641, 0.0
        %1650 = vst [vmem:[%s332] sm:$0xff] %v1642
        %1651 = vst [vmem:[%s332 + $0x8] sm:$0xff] %v1643
        %1652 = vst [vmem:[%s332 + $0x10] sm:$0xff] %v1644
        %1653 = vst [vmem:[%s332 + $0x18] sm:$0xff] %v1645
        %1654 = vst [vmem:[%s332 + $0x20] sm:$0xff] %v1646
        %1655 = vst [vmem:[%s332 + $0x28] sm:$0xff] %v1647
        %1656 = vst [vmem:[%s332 + $0x30] sm:$0xff] %v1648
        %1657 = vst [vmem:[%s332 + $0x38] sm:$0xff] %v1649
        %s1658 = sand.u32 %s166, 1
        %s1659 = scalar_lea.sflag [#allocation4], %s1658
        %s1660 = sand.u32 %s166, 1
        %s1661 = smul.addr %s1660, 64
        %s1662 = scalar_lea.vmem [#allocation5], %s1661
        %s1663 = sand.u32 %s27, 1
        %s1664 = scalar_lea.sflag [#allocation7], %s1663
        %s1665 = sand.u32 %s192, 1
        %s1666 = smul.addr %s1665, 64
        %s1667 = scalar_lea.vmem [#allocation6], %s1666
        %s1668 = sand.u32 %s27, 1
        %s1669 = scalar_lea.sflag [#allocation7], %s1668
        %s1670 = sand.u32 %s218, 1
        %s1671 = smul.addr %s1670, 64
        %s1672 = scalar_lea.vmem [#allocation8], %s1671
        // Predicated region
        $region49: #{tpu_custom_call.1} parent=43 // pred_check
          %p1673 = pneg %p176
        $region50: #{tpu_custom_call.1} parent=43 // pred_check_branch
          %1675 = sbr.rel (%p1673) target = $region52
        $region51: #{tpu_custom_call.1} parent=43 // pred_region
          %s1676 = smul.u32 8, %s27
          %s1678 = ssub.s32 1024, 1024
          %1679 = vsyncadd %s1659, %s1678
          %s1680 = smul.addr %s1676, 128
          %s1681 = scalar_lea.hbm %s6, %s1680
          %s1682 = sshll.u32 %s1662, 4
          %s1683 = int_to_ptr.vmem [resolvable:$true] %s1682
          %1688 = dma.vmem_to_hbm [thread:$0]  %s1683, 1024, %s1681, %s1659, 128, 128, 8
        $region52: #{tpu_custom_call.1} parent=43 // pred_fallthru
          _
        // Predicated region
        $region53: #{tpu_custom_call.1} parent=43 // pred_check
          %p1689 = pneg %p202
        $region54: #{tpu_custom_call.1} parent=43 // pred_check_branch
          %1691 = sbr.rel (%p1689) target = $region56
        $region55: #{tpu_custom_call.1} parent=43 // pred_region
          %s1692 = smul.u32 8, %s27
          %s1694 = ssub.s32 1024, 1024
          %1695 = vsyncadd %s1664, %s1694
          %s1696 = smul.addr %s1692, 128
          %s1697 = scalar_lea.hbm %s7, %s1696
          %s1698 = sshll.u32 %s1667, 4
          %s1699 = int_to_ptr.vmem [resolvable:$true] %s1698
          %1704 = dma.vmem_to_hbm [thread:$0]  %s1699, 1024, %s1697, %s1664, 128, 128, 8
        $region56: #{tpu_custom_call.1} parent=43 // pred_fallthru
          _
        // Predicated region
        $region57: #{tpu_custom_call.1} parent=43 // pred_check
          %p1705 = pneg %p228
        $region58: #{tpu_custom_call.1} parent=43 // pred_check_branch
          %1707 = sbr.rel (%p1705) target = $region60
        $region59: #{tpu_custom_call.1} parent=43 // pred_region
          %s1708 = smul.u32 8, %s27
          %s1710 = ssub.s32 1024, 1024
          %1711 = vsyncadd %s1669, %s1710
          %s1712 = smul.addr %s1708, 128
          %s1713 = scalar_lea.hbm %s8, %s1712
          %s1714 = sshll.u32 %s1672, 4
          %s1715 = int_to_ptr.vmem [resolvable:$true] %s1714
          %1720 = dma.vmem_to_hbm [thread:$0]  %s1715, 1024, %s1713, %s1669, 128, 128, 8
        $region60: #{tpu_custom_call.1} parent=43 // pred_fallthru
          _
      $region44: #{tpu_custom_call.1} parent=5 // pred_fallthru
        _
      %p1721 = scmp.le.s32.totalorder 2, %s22
      // Predicated region
      $region61: #{tpu_custom_call.1} parent=5 // pred_check
        %p1722 = pneg %p1721
      $region62: #{tpu_custom_call.1} parent=5 // pred_check_branch
        %1724 = sbr.rel (%p1722) target = $region64
      $region63: #{tpu_custom_call.1} parent=5 // pred_region
        %s1725 = ssub.s32 %s22, 2
        // Predicated region
        $region65: #{tpu_custom_call.1} parent=63 // pred_check
          %p1726 = pneg %p182
        $region66: #{tpu_custom_call.1} parent=63 // pred_check_branch
          %1728 = sbr.rel (%p1726) target = $region68
        $region67: #{tpu_custom_call.1} parent=63 // pred_region
          %s1729 = sand.u32 %s167, 1
          %s1730 = scalar_lea.sflag [#allocation4], %s1729
          %s1731 = sand.u32 %s167, 1
          %s1732 = smul.addr %s1731, 64
          %s1733 = scalar_lea.vmem [#allocation5], %s1732
          %1734 = dma.done %s1730, 1024
        $region68: #{tpu_custom_call.1} parent=63 // pred_fallthru
          _
        // Predicated region
        $region69: #{tpu_custom_call.1} parent=63 // pred_check
          %p1735 = pneg %p208
        $region70: #{tpu_custom_call.1} parent=63 // pred_check_branch
          %1737 = sbr.rel (%p1735) target = $region72
        $region71: #{tpu_custom_call.1} parent=63 // pred_region
          %s1738 = sand.u32 %s28, 1
          %s1739 = scalar_lea.sflag [#allocation7], %s1738
          %s1740 = sand.u32 %s193, 1
          %s1741 = smul.addr %s1740, 64
          %s1742 = scalar_lea.vmem [#allocation6], %s1741
          %1743 = dma.done %s1739, 1024
        $region72: #{tpu_custom_call.1} parent=63 // pred_fallthru
          _
        // Predicated region
        $region73: #{tpu_custom_call.1} parent=63 // pred_check
          %p1744 = pneg %p234
        $region74: #{tpu_custom_call.1} parent=63 // pred_check_branch
          %1746 = sbr.rel (%p1744) target = $region76
        $region75: #{tpu_custom_call.1} parent=63 // pred_region
          %s1747 = sand.u32 %s28, 1
          %s1748 = scalar_lea.sflag [#allocation7], %s1747
          %s1749 = sand.u32 %s219, 1
          %s1750 = smul.addr %s1749, 64
          %s1751 = scalar_lea.vmem [#allocation8], %s1750
          %1752 = dma.done %s1748, 1024
        $region76: #{tpu_custom_call.1} parent=63 // pred_fallthru
          _
      $region64: #{tpu_custom_call.1} parent=5 // pred_fallthru
        _
    $region6: #{tpu_custom_call.1} parent=1 // loop_footer
      %s26 = sadd.s32 1, %s22
    $region7: #{tpu_custom_call.1} parent=1 // loop_footer_branch
      %21 = sbr.rel target = $region3
    $region8: #{tpu_custom_call.1} parent=1 // loop_exit
      _
    %1753 = vsyncpa [#allocation3], 1
    %s1754 = scalar_lea.sflag [#allocation3], 1
    %1755 = vsyncpa %s1754, 1
    %1756 = vsyncpa [#allocation4], 1
    %s1757 = scalar_lea.sflag [#allocation4], 1
    %1758 = vsyncpa %s1757, 1
    %1759 = vsyncpa [#allocation7], 1
    %s1760 = scalar_lea.sflag [#allocation7], 1
    %1761 = vsyncpa %s1760, 1

</llo_original>
